<compile_context>
chip_gen: v7x
topology: tpu7x:2x2x1
jax: 0.10.0
libtpu: 0.0.40
codegen_flags: <defaults>
</compile_context>

<pallas_src>
import functools

import numpy as np
import jax
import jax.numpy as jnp
from jax import lax
from jax.experimental import pallas as pl
from jax.experimental.pallas import tpu as pltpu

EPS_IN = 1e-5   # nn.InstanceNorm2d default eps (affine=False, no running stats)
EPS_LN = 1e-5   # nn.LayerNorm default eps


def residual_block_kernel(
    xpad_ref,   # (1, Hp, Wp*C)          lane-dense padded NHWC input
    m1_ref,     # (3, Wp*C, W*C)         banded conv1 weights, one slab per ky tap
    bd2_ref,    # (W*C, W*C)             block-diagonal conv2 (1x1) weights
    rrt_ref,    # (W*C, W*C)             per-channel group-sum + broadcast (0/1)
    pavg_ref,   # (W*C, W*C)             per-pixel channel-mean + broadcast (1/C blocks)
    lng_ref,    # (1, W*C)               LayerNorm gamma, tiled over pixels
    lnb_ref,    # (1, W*C)               LayerNorm beta,  tiled over pixels
    sel_ref,    # (W*C, W*C*K)           K-way per-channel replication selector (0/1)
    rg_ref,     # (1, W*C*K)             RBF grid, per-slot
    ga_ref,     # (1, W*C*K)             left B-spline knot g_w, per-slot
    wkan_ref,   # (W*C*K + W*C, W*C)     stacked [spline ; base] block-diag KAN weights
    out_ref,    # (1, H, W*C)            output, NHWC-flattened per row
    *, H, W, C, dil, knot_h, rbf_denom, mxu_dtype,
):
    f32 = jnp.float32
    inv_s = 1.0 / float(H * W)

    def mm(a, b):        # compute-path matmul (bf16 operands on v6e/v7x if requested)
        return jnp.dot(a.astype(mxu_dtype), b.astype(mxu_dtype),
                       preferred_element_type=f32)

    def mmf(a, b):       # statistics / replication matmul — always f32
        return jnp.dot(a, b, preferred_element_type=f32)

    xp = xpad_ref[0]                                            # (Hp, Wp*C)

    # ---- conv1: dilated 3x3 conv = 3 row-band matmuls vs banded weights -------------
    acc = mm(xp[0:H, :], m1_ref[0])
    acc = acc + mm(xp[dil:dil + H, :], m1_ref[1])
    acc = acc + mm(xp[2 * dil:2 * dil + H, :], m1_ref[2])       # (H, W*C)

    rrt = rrt_ref[...]

    # ---- InstanceNorm2d #1 (two-pass stats) + ReLU -----------------------------------
    mu = mmf(jnp.sum(acc, axis=0, keepdims=True), rrt) * inv_s
    d = acc - mu
    var = mmf(jnp.sum(d * d, axis=0, keepdims=True), rrt) * inv_s
    y = jnp.maximum(d * lax.rsqrt(var + EPS_IN), 0.0)

    # ---- conv2 (1x1) as block-diagonal matmul + InstanceNorm2d #2 --------------------
    y2 = mm(y, bd2_ref[...])
    mu2 = mmf(jnp.sum(y2, axis=0, keepdims=True), rrt) * inv_s
    d2 = y2 - mu2
    var2 = mmf(jnp.sum(d2 * d2, axis=0, keepdims=True), rrt) * inv_s
    y2 = d2 * lax.rsqrt(var2 + EPS_IN)
    # TODO(synk): nn.Dropout(p=0.1) training-mode masking not implemented (eval => identity).

    # ---- BSRBF_KANLayer on the residual (= center window of the padded tile) --------
    xr = xp[dil:dil + H, dil * C:dil * C + W * C]               # (H, W*C)
    pavg = pavg_ref[...]
    mu_p = mmf(xr, pavg)                                        # per-pixel channel mean
    dp = xr - mu_p
    var_p = mmf(dp * dp, pavg)
    xn = dp * lax.rsqrt(var_p + EPS_LN) * lng_ref[...] + lnb_ref[...]

    # per-channel K-way replication via ONE selector matmul (no broadcast/concat loop)
    xflat = mmf(xn, sel_ref[...])                               # (H, W*C*K)

    # radial basis functions
    rbf = jnp.exp(-(((xflat - rg_ref[...]) * (1.0 / rbf_denom)) ** 2))

    # cubic B-spline bases: closed-form cardinal spline on the uniform knot grid
    # (exactly equals the Cox-de Boor recursion for uniform knots; no cross-lane ops)
    t = (xflat - ga_ref[...]) * (1.0 / knot_h)
    t2 = t * t
    t3 = t2 * t
    p0 = t3 * (1.0 / 6.0)
    p1 = (-3.0 * t3 + 12.0 * t2 - 12.0 * t + 4.0) * (1.0 / 6.0)
    p2 = (3.0 * t3 - 24.0 * t2 + 60.0 * t - 44.0) * (1.0 / 6.0)
    u = 4.0 - t
    p3 = u * u * u * (1.0 / 6.0)
    bases = jnp.where(t < 1.0, p0,
            jnp.where(t < 2.0, p1,
            jnp.where(t < 3.0, p2, p3)))
    bases = jnp.where(jnp.logical_and(t >= 0.0, t < 4.0), bases, 0.0)

    # fused base + spline branch: one MXU matmul against stacked block-diag weights
    feats = jnp.concatenate([bases + rbf, jnp.maximum(xn, 0.0)], axis=-1)
    kan = mm(feats, wkan_ref[...])                              # (H, W*C)

    # ---- residual add + ReLU ----------------------------------------------------------
    out_ref[0] = jnp.maximum(y2 + kan, 0.0)


def make_params(key, C, grid_size=5, spline_order=3, grid_min=-1.5, grid_max=1.5):
    K = grid_size + spline_order
    k1, k2, k3, k4 = jax.random.split(key, 4)
    w1 = 0.25 * jax.random.normal(k1, (3, 3, C, C), jnp.float32)     # (ky, kx, cin, cout)
    w2 = 0.25 * jax.random.normal(k2, (C, C), jnp.float32)           # (cin, cout)
    base_w = 0.25 * jax.random.normal(k3, (C, C), jnp.float32)       # base_weight^T
    spline_w = 0.10 * jax.random.normal(k4, (C, K, C), jnp.float32)  # (cin, k, cout)
    ln_g = jnp.ones((1, C), jnp.float32)
    ln_b = jnp.zeros((1, C), jnp.float32)
    rbf_grid = jnp.linspace(grid_min, grid_max, K).astype(jnp.float32).reshape(1, K)
    rbf_denom = (grid_max - grid_min) / (K - 1)
    h = (grid_max - grid_min) / grid_size
    row = jnp.arange(-spline_order, grid_size + spline_order + 1,
                     dtype=jnp.float32) * h + grid_min                # (G,)
    spl_grid = jnp.tile(row[None, :], (C, 1))                         # (C, G)
    return dict(w1=w1, w2=w2, base_w=base_w, spline_w=spline_w,
                ln_g=ln_g, ln_b=ln_b, rbf_grid=rbf_grid, rbf_denom=float(rbf_denom),
                spl_grid=spl_grid, grid_size=grid_size, spline_order=spline_order,
                h=float(h))


def _build_tables(p, H, W, C, d):
    """Wrapper-side constant tables for the lane-dense (H, W*C) kernel layout."""
    K = p['grid_size'] + p['spline_order']
    WC = W * C
    Wp = W + 2 * d

    # banded conv1 weights: (A_ky @ m1[ky]) sums over kx, cin for each output (j, cout)
    w1 = np.asarray(p['w1'], np.float32)                       # (ky, kx, cin, cout)
    m1 = np.zeros((3, Wp * C, WC), np.float32)
    for ky in range(3):
        for kx in range(3):
            for j in range(W):
                q = j + kx * d
                m1[ky, q * C:(q + 1) * C, j * C:(j + 1) * C] = w1[ky, kx]

    w2 = np.asarray(p['w2'], np.float32)                       # (cin, cout)
    bd2 = np.kron(np.eye(W, dtype=np.float32), w2)             # block-diag 1x1 conv

    lane = np.arange(WC)
    rrt = (lane[:, None] % C == lane[None, :] % C).astype(np.float32)          # channel sum+bcast
    pavg = (lane[:, None] // C == lane[None, :] // C).astype(np.float32) / C   # pixel mean+bcast

    lng = np.tile(np.asarray(p['ln_g'], np.float32).reshape(1, C), (1, W))
    lnb = np.tile(np.asarray(p['ln_b'], np.float32).reshape(1, C), (1, W))

    sel = np.kron(np.eye(WC, dtype=np.float32), np.ones((1, K), np.float32))   # (WC, WC*K)

    rbf_row = np.asarray(p['rbf_grid'], np.float32).reshape(-1)                # (K,)
    rg = np.tile(rbf_row, WC).reshape(1, WC * K)
    knots = np.asarray(p['spl_grid'], np.float32)[0, :K]                       # left knots g_0..g_{K-1}
    ga = np.tile(knots, WC).reshape(1, WC * K)

    splw = np.asarray(p['spline_w'], np.float32)               # (cin, k, cout)
    base_w = np.asarray(p['base_w'], np.float32)               # (cin, cout)
    wkan = np.zeros((WC * K + WC, WC), np.float32)
    for j in range(W):
        for c in range(C):
            wkan[(j * C + c) * K:(j * C + c + 1) * K, j * C:(j + 1) * C] = splw[c]
        wkan[WC * K + j * C:WC * K + (j + 1) * C, j * C:(j + 1) * C] = base_w

    return tuple(jnp.asarray(a) for a in
                 (m1, bd2, rrt, pavg, lng, lnb, sel, rg, ga, wkan))


def residual_block_pallas(x_nchw, p, dilation, mxu_dtype=jnp.float32):
    B, C, H, W = x_nchw.shape
    d = dilation
    assert p['spline_order'] == 3, "kernel hardcodes the cubic closed-form B-spline"
    K = p['grid_size'] + p['spline_order']
    Hp, Wp = H + 2 * d, W + 2 * d
    WC = W * C

    # lane-dense padded input: NCHW -> NHWC -> pad -> (B, Hp, Wp*C)
    x_nhwc = jnp.transpose(x_nchw, (0, 2, 3, 1))
    xpad = jnp.pad(x_nhwc, ((0, 0), (d, d), (d, d), (0, 0))).reshape(B, Hp, Wp * C)

    m1, bd2, rrt, pavg, lng, lnb, sel, rg, ga, wkan = _build_tables(p, H, W, C, d)

    kernel = functools.partial(
        residual_block_kernel,
        H=H, W=W, C=C, dil=d,
        knot_h=float(p['h']), rbf_denom=float(p['rbf_denom']),
        mxu_dtype=mxu_dtype,
    )

    out = pl.pallas_call(
        kernel,
        out_shape=jax.ShapeDtypeStruct((B, H, WC), jnp.float32),
        grid_spec=pltpu.PrefetchScalarGridSpec(
            num_scalar_prefetch=0,
            grid=(B,),
            in_specs=[
                pl.BlockSpec((1, Hp, Wp * C), lambda b: (b, 0, 0)),        # xpad
                pl.BlockSpec((3, Wp * C, WC), lambda b: (0, 0, 0)),        # m1 (banded conv1)
                pl.BlockSpec((WC, WC), lambda b: (0, 0)),                  # bd2
                pl.BlockSpec((WC, WC), lambda b: (0, 0)),                  # rrt
                pl.BlockSpec((WC, WC), lambda b: (0, 0)),                  # pavg
                pl.BlockSpec((1, WC), lambda b: (0, 0)),                   # ln gamma (wide)
                pl.BlockSpec((1, WC), lambda b: (0, 0)),                   # ln beta  (wide)
                pl.BlockSpec((WC, WC * K), lambda b: (0, 0)),              # sel
                pl.BlockSpec((1, WC * K), lambda b: (0, 0)),               # rbf grid (wide)
                pl.BlockSpec((1, WC * K), lambda b: (0, 0)),               # left knots (wide)
                pl.BlockSpec((WC * K + WC, WC), lambda b: (0, 0)),         # stacked KAN weights
            ],
            out_specs=pl.BlockSpec((1, H, WC), lambda b: (b, 0, 0)),
        ),
        compiler_params=pltpu.CompilerParams(
            dimension_semantics=("parallel",),            # v7x: one image per TensorCore
            vmem_limit_bytes=32 * 1024 * 1024,
        ),
    )(xpad, m1, bd2, rrt, pavg, lng, lnb, sel, rg, ga, wkan)

    # (B, H, W*C) is NHWC-flattened; tiny wrapper-side permute to NCHW
    return jnp.transpose(out.reshape(B, H, W, C), (0, 3, 1, 2))


def reference_forward(x_nchw, p, dilation):
    """Pure-JAX reference matching the PyTorch ResidualBlock.forward (eval mode)."""
    hp = lax.Precision.HIGHEST
    d = dilation
    B, C, H, W = x_nchw.shape
    spline_order = p['spline_order']

    w_oihw = jnp.transpose(p['w1'], (3, 2, 0, 1))
    c1 = lax.conv_general_dilated(
        x_nchw, w_oihw, (1, 1), ((d, d), (d, d)), rhs_dilation=(d, d),
        dimension_numbers=('NCHW', 'OIHW', 'NCHW'), precision=hp)
    mu = c1.mean(axis=(2, 3), keepdims=True)
    var = ((c1 - mu) ** 2).mean(axis=(2, 3), keepdims=True)
    y = jax.nn.relu((c1 - mu) / jnp.sqrt(var + EPS_IN))

    c2 = jnp.einsum('nihw,io->nohw', y, p['w2'], precision=hp)
    mu2 = c2.mean(axis=(2, 3), keepdims=True)
    var2 = ((c2 - mu2) ** 2).mean(axis=(2, 3), keepdims=True)
    y2 = (c2 - mu2) / jnp.sqrt(var2 + EPS_IN)          # dropout = identity (eval)

    xr = x_nchw.reshape(B, C, H * W).transpose(0, 2, 1)          # (B, S, C)
    mu_l = xr.mean(axis=-1, keepdims=True)
    var_l = ((xr - mu_l) ** 2).mean(axis=-1, keepdims=True)
    xn = (xr - mu_l) / jnp.sqrt(var_l + EPS_LN) * p['ln_g'] + p['ln_b']

    base_out = jnp.einsum('bsc,co->bso', jax.nn.relu(xn), p['base_w'], precision=hp)

    xe = xn[..., None]
    rbf = jnp.exp(-(((xe - p['rbf_grid'].reshape(-1)) / p['rbf_denom']) ** 2))

    g = p['spl_grid']
    bases = ((xe >= g[:, :-1]) & (xe < g[:, 1:])).astype(jnp.float32)
    for k in range(1, spline_order + 1):
        bases = (
            (xe - g[:, :-(k + 1)]) / (g[:, k:-1] - g[:, :-(k + 1)]) * bases[..., :-1]
            + (g[:, k + 1:] - xe) / (g[:, k + 1:] - g[:, 1:-k]) * bases[..., 1:]
        )
    bsrbf = bases + rbf                                          # (B, S, C, K)
    spl_out = jnp.einsum('bsck,cko->bso', bsrbf, p['spline_w'], precision=hp)

    kan = (base_out + spl_out).transpose(0, 2, 1).reshape(B, C, H, W)
    return jax.nn.relu(y2 + kan)


if __name__ == "__main__":
    B, C, H, W = 2, 4, 16, 16
    dilation = 2

    key = jax.random.PRNGKey(0)
    kx, kp = jax.random.split(key)
    x = jax.random.normal(kx, (B, C, H, W), jnp.float32)
    params = make_params(kp, C)

    out = jax.block_until_ready(residual_block_pallas(x, params, dilation))
    ref = jax.block_until_ready(reference_forward(x, params, dilation))

    assert out.shape == (B, C, H, W), out.shape
    if not bool(jnp.allclose(out, ref, atol=2e-3, rtol=2e-3)):
        raise AssertionError(
            f"mismatch vs reference, max abs err = {float(jnp.max(jnp.abs(out - ref)))}")
    print("KERNEL_OK")
</pallas_src>

<mosaic_0001>
module attributes {stable_mosaic.version = 11 : i64} {
  func.func @residual_block_kernel(%arg0: i32, %arg1: memref<1x20x80xf32, #tpu.memory_space<vmem>>, %arg2: memref<3x80x64xf32, #tpu.memory_space<vmem>>, %arg3: memref<64x64xf32, #tpu.memory_space<vmem>>, %arg4: memref<64x64xf32, #tpu.memory_space<vmem>>, %arg5: memref<64x64xf32, #tpu.memory_space<vmem>>, %arg6: memref<1x64xf32, #tpu.memory_space<vmem>>, %arg7: memref<1x64xf32, #tpu.memory_space<vmem>>, %arg8: memref<64x512xf32, #tpu.memory_space<vmem>>, %arg9: memref<1x512xf32, #tpu.memory_space<vmem>>, %arg10: memref<1x512xf32, #tpu.memory_space<vmem>>, %arg11: memref<576x64xf32, #tpu.memory_space<vmem>>, %arg12: memref<1x16x64xf32, #tpu.memory_space<vmem>>) attributes {dimension_semantics = [#tpu.dimension_semantics<parallel>], iteration_bounds = array<i64: 2>, scalar_prefetch = 0 : i64, scratch_operands = 0 : i64, tpu.core_type = #tpu.core_type<tc>, window_params = [{transform_indices = @transform_0, window_bounds = array<i64: 1, 20, 80>}, {pipeline_mode = #tpu.pipeline_mode<synchronous>, transform_indices = @transform_1, window_bounds = array<i64: 3, 80, 64>}, {pipeline_mode = #tpu.pipeline_mode<synchronous>, transform_indices = @transform_2, window_bounds = array<i64: 64, 64>}, {pipeline_mode = #tpu.pipeline_mode<synchronous>, transform_indices = @transform_3, window_bounds = array<i64: 64, 64>}, {pipeline_mode = #tpu.pipeline_mode<synchronous>, transform_indices = @transform_4, window_bounds = array<i64: 64, 64>}, {pipeline_mode = #tpu.pipeline_mode<synchronous>, transform_indices = @transform_5, window_bounds = array<i64: 1, 64>}, {pipeline_mode = #tpu.pipeline_mode<synchronous>, transform_indices = @transform_6, window_bounds = array<i64: 1, 64>}, {pipeline_mode = #tpu.pipeline_mode<synchronous>, transform_indices = @transform_7, window_bounds = array<i64: 64, 512>}, {pipeline_mode = #tpu.pipeline_mode<synchronous>, transform_indices = @transform_8, window_bounds = array<i64: 1, 512>}, {pipeline_mode = #tpu.pipeline_mode<synchronous>, transform_indices = @transform_9, window_bounds = array<i64: 1, 512>}, {pipeline_mode = #tpu.pipeline_mode<synchronous>, transform_indices = @transform_10, window_bounds = array<i64: 576, 64>}, {transform_indices = @transform_11, window_bounds = array<i64: 1, 16, 64>}]} {
    %c0 = arith.constant 0 : index
    %c0_0 = arith.constant 0 : index
    %c0_1 = arith.constant 0 : index
    %0 = vector.load %arg1[%c0, %c0_0, %c0_1] : memref<1x20x80xf32, #tpu.memory_space<vmem>>, vector<1x20x80xf32>
    %1 = vector.shape_cast %0 : vector<1x20x80xf32> to vector<20x80xf32>
    %2 = vector.extract_strided_slice %1 {offsets = [0, 0], sizes = [16, 80], strides = [1, 1]} : vector<20x80xf32> to vector<16x80xf32>
    %c0_2 = arith.constant 0 : index
    %c0_3 = arith.constant 0 : index
    %c0_4 = arith.constant 0 : index
    %3 = vector.load %arg2[%c0_2, %c0_3, %c0_4] : memref<3x80x64xf32, #tpu.memory_space<vmem>>, vector<1x80x64xf32>
    %4 = vector.shape_cast %3 : vector<1x80x64xf32> to vector<80x64xf32>
    %cst = arith.constant dense<0.000000e+00> : vector<16x64xf32>
    %5 = tpu.matmul %2, %4, %cst {dimension_numbers = #tpu.dot_dimension_numbers<[1], [0], [0], [1], [0, 0, 1, 1], [], []>} : vector<16x80xf32>, vector<80x64xf32>, vector<16x64xf32> -> vector<16x64xf32>
    %6 = vector.extract_strided_slice %1 {offsets = [2, 0], sizes = [16, 80], strides = [1, 1]} : vector<20x80xf32> to vector<16x80xf32>
    %c1 = arith.constant 1 : index
    %c0_5 = arith.constant 0 : index
    %c0_6 = arith.constant 0 : index
    %7 = vector.load %arg2[%c1, %c0_5, %c0_6] : memref<3x80x64xf32, #tpu.memory_space<vmem>>, vector<1x80x64xf32>
    %8 = vector.shape_cast %7 : vector<1x80x64xf32> to vector<80x64xf32>
    %cst_7 = arith.constant dense<0.000000e+00> : vector<16x64xf32>
    %9 = tpu.matmul %6, %8, %cst_7 {dimension_numbers = #tpu.dot_dimension_numbers<[1], [0], [0], [1], [0, 0, 1, 1], [], []>} : vector<16x80xf32>, vector<80x64xf32>, vector<16x64xf32> -> vector<16x64xf32>
    %10 = arith.addf %5, %9 : vector<16x64xf32>
    %11 = vector.extract_strided_slice %1 {offsets = [4, 0], sizes = [16, 80], strides = [1, 1]} : vector<20x80xf32> to vector<16x80xf32>
    %c2 = arith.constant 2 : index
    %c0_8 = arith.constant 0 : index
    %c0_9 = arith.constant 0 : index
    %12 = vector.load %arg2[%c2, %c0_8, %c0_9] : memref<3x80x64xf32, #tpu.memory_space<vmem>>, vector<1x80x64xf32>
    %13 = vector.shape_cast %12 : vector<1x80x64xf32> to vector<80x64xf32>
    %cst_10 = arith.constant dense<0.000000e+00> : vector<16x64xf32>
    %14 = tpu.matmul %11, %13, %cst_10 {dimension_numbers = #tpu.dot_dimension_numbers<[1], [0], [0], [1], [0, 0, 1, 1], [], []>} : vector<16x80xf32>, vector<80x64xf32>, vector<16x64xf32> -> vector<16x64xf32>
    %15 = arith.addf %10, %14 : vector<16x64xf32>
    %c0_11 = arith.constant 0 : index
    %c0_12 = arith.constant 0 : index
    %16 = vector.load %arg4[%c0_11, %c0_12] : memref<64x64xf32, #tpu.memory_space<vmem>>, vector<64x64xf32>
    %cst_13 = arith.constant dense<0.000000e+00> : vector<64xf32>
    %17 = vector.multi_reduction <add>, %15, %cst_13 [0] : vector<16x64xf32> to vector<64xf32>
    %18 = vector.shape_cast %17 : vector<64xf32> to vector<1x64xf32>
    %cst_14 = arith.constant dense<0.000000e+00> : vector<1x64xf32>
    %19 = tpu.matmul %18, %16, %cst_14 {dimension_numbers = #tpu.dot_dimension_numbers<[1], [0], [0], [1], [0, 0, 1, 1], [], []>} : vector<1x64xf32>, vector<64x64xf32>, vector<1x64xf32> -> vector<1x64xf32>
    %cst_15 = arith.constant 3.906250e-03 : f32
    %20 = vector.broadcast %cst_15 : f32 to vector<1x64xf32>
    %21 = arith.mulf %19, %20 : vector<1x64xf32>
    %22 = vector.broadcast %21 : vector<1x64xf32> to vector<16x64xf32>
    %23 = arith.subf %15, %22 : vector<16x64xf32>
    %24 = arith.mulf %23, %23 : vector<16x64xf32>
    %cst_16 = arith.constant dense<0.000000e+00> : vector<64xf32>
    %25 = vector.multi_reduction <add>, %24, %cst_16 [0] : vector<16x64xf32> to vector<64xf32>
    %26 = vector.shape_cast %25 : vector<64xf32> to vector<1x64xf32>
    %cst_17 = arith.constant dense<0.000000e+00> : vector<1x64xf32>
    %27 = tpu.matmul %26, %16, %cst_17 {dimension_numbers = #tpu.dot_dimension_numbers<[1], [0], [0], [1], [0, 0, 1, 1], [], []>} : vector<1x64xf32>, vector<64x64xf32>, vector<1x64xf32> -> vector<1x64xf32>
    %cst_18 = arith.constant 3.906250e-03 : f32
    %28 = vector.broadcast %cst_18 : f32 to vector<1x64xf32>
    %29 = arith.mulf %27, %28 : vector<1x64xf32>
    %cst_19 = arith.constant 9.99999974E-6 : f32
    %30 = vector.broadcast %cst_19 : f32 to vector<1x64xf32>
    %31 = arith.addf %29, %30 : vector<1x64xf32>
    %32 = math.rsqrt %31 : vector<1x64xf32>
    %33 = vector.broadcast %32 : vector<1x64xf32> to vector<16x64xf32>
    %34 = arith.mulf %23, %33 : vector<16x64xf32>
    %cst_20 = arith.constant 0.000000e+00 : f32
    %35 = vector.broadcast %cst_20 : f32 to vector<16x64xf32>
    %36 = arith.maximumf %34, %35 : vector<16x64xf32>
    %c0_21 = arith.constant 0 : index
    %c0_22 = arith.constant 0 : index
    %37 = vector.load %arg3[%c0_21, %c0_22] : memref<64x64xf32, #tpu.memory_space<vmem>>, vector<64x64xf32>
    %cst_23 = arith.constant dense<0.000000e+00> : vector<16x64xf32>
    %38 = tpu.matmul %36, %37, %cst_23 {dimension_numbers = #tpu.dot_dimension_numbers<[1], [0], [0], [1], [0, 0, 1, 1], [], []>} : vector<16x64xf32>, vector<64x64xf32>, vector<16x64xf32> -> vector<16x64xf32>
    %cst_24 = arith.constant dense<0.000000e+00> : vector<64xf32>
    %39 = vector.multi_reduction <add>, %38, %cst_24 [0] : vector<16x64xf32> to vector<64xf32>
    %40 = vector.shape_cast %39 : vector<64xf32> to vector<1x64xf32>
    %cst_25 = arith.constant dense<0.000000e+00> : vector<1x64xf32>
    %41 = tpu.matmul %40, %16, %cst_25 {dimension_numbers = #tpu.dot_dimension_numbers<[1], [0], [0], [1], [0, 0, 1, 1], [], []>} : vector<1x64xf32>, vector<64x64xf32>, vector<1x64xf32> -> vector<1x64xf32>
    %cst_26 = arith.constant 3.906250e-03 : f32
    %42 = vector.broadcast %cst_26 : f32 to vector<1x64xf32>
    %43 = arith.mulf %41, %42 : vector<1x64xf32>
    %44 = vector.broadcast %43 : vector<1x64xf32> to vector<16x64xf32>
    %45 = arith.subf %38, %44 : vector<16x64xf32>
    %46 = arith.mulf %45, %45 : vector<16x64xf32>
    %cst_27 = arith.constant dense<0.000000e+00> : vector<64xf32>
    %47 = vector.multi_reduction <add>, %46, %cst_27 [0] : vector<16x64xf32> to vector<64xf32>
    %48 = vector.shape_cast %47 : vector<64xf32> to vector<1x64xf32>
    %cst_28 = arith.constant dense<0.000000e+00> : vector<1x64xf32>
    %49 = tpu.matmul %48, %16, %cst_28 {dimension_numbers = #tpu.dot_dimension_numbers<[1], [0], [0], [1], [0, 0, 1, 1], [], []>} : vector<1x64xf32>, vector<64x64xf32>, vector<1x64xf32> -> vector<1x64xf32>
    %cst_29 = arith.constant 3.906250e-03 : f32
    %50 = vector.broadcast %cst_29 : f32 to vector<1x64xf32>
    %51 = arith.mulf %49, %50 : vector<1x64xf32>
    %cst_30 = arith.constant 9.99999974E-6 : f32
    %52 = vector.broadcast %cst_30 : f32 to vector<1x64xf32>
    %53 = arith.addf %51, %52 : vector<1x64xf32>
    %54 = math.rsqrt %53 : vector<1x64xf32>
    %55 = vector.broadcast %54 : vector<1x64xf32> to vector<16x64xf32>
    %56 = arith.mulf %45, %55 : vector<16x64xf32>
    %57 = vector.extract_strided_slice %1 {offsets = [2, 8], sizes = [16, 64], strides = [1, 1]} : vector<20x80xf32> to vector<16x64xf32>
    %c0_31 = arith.constant 0 : index
    %c0_32 = arith.constant 0 : index
    %58 = vector.load %arg5[%c0_31, %c0_32] : memref<64x64xf32, #tpu.memory_space<vmem>>, vector<64x64xf32>
    %cst_33 = arith.constant dense<0.000000e+00> : vector<16x64xf32>
    %59 = tpu.matmul %57, %58, %cst_33 {dimension_numbers = #tpu.dot_dimension_numbers<[1], [0], [0], [1], [0, 0, 1, 1], [], []>} : vector<16x64xf32>, vector<64x64xf32>, vector<16x64xf32> -> vector<16x64xf32>
    %60 = arith.subf %57, %59 : vector<16x64xf32>
    %61 = arith.mulf %60, %60 : vector<16x64xf32>
    %cst_34 = arith.constant dense<0.000000e+00> : vector<16x64xf32>
    %62 = tpu.matmul %61, %58, %cst_34 {dimension_numbers = #tpu.dot_dimension_numbers<[1], [0], [0], [1], [0, 0, 1, 1], [], []>} : vector<16x64xf32>, vector<64x64xf32>, vector<16x64xf32> -> vector<16x64xf32>
    %cst_35 = arith.constant 9.99999974E-6 : f32
    %63 = vector.broadcast %cst_35 : f32 to vector<16x64xf32>
    %64 = arith.addf %62, %63 : vector<16x64xf32>
    %65 = math.rsqrt %64 : vector<16x64xf32>
    %66 = arith.mulf %60, %65 : vector<16x64xf32>
    %c0_36 = arith.constant 0 : index
    %c0_37 = arith.constant 0 : index
    %67 = vector.load %arg6[%c0_36, %c0_37] : memref<1x64xf32, #tpu.memory_space<vmem>>, vector<1x64xf32>
    %68 = vector.broadcast %67 : vector<1x64xf32> to vector<16x64xf32>
    %69 = arith.mulf %66, %68 : vector<16x64xf32>
    %c0_38 = arith.constant 0 : index
    %c0_39 = arith.constant 0 : index
    %70 = vector.load %arg7[%c0_38, %c0_39] : memref<1x64xf32, #tpu.memory_space<vmem>>, vector<1x64xf32>
    %71 = vector.broadcast %70 : vector<1x64xf32> to vector<16x64xf32>
    %72 = arith.addf %69, %71 : vector<16x64xf32>
    %c0_40 = arith.constant 0 : index
    %c0_41 = arith.constant 0 : index
    %73 = vector.load %arg8[%c0_40, %c0_41] : memref<64x512xf32, #tpu.memory_space<vmem>>, vector<64x512xf32>
    %cst_42 = arith.constant dense<0.000000e+00> : vector<16x512xf32>
    %74 = tpu.matmul %72, %73, %cst_42 {dimension_numbers = #tpu.dot_dimension_numbers<[1], [0], [0], [1], [0, 0, 1, 1], [], []>} : vector<16x64xf32>, vector<64x512xf32>, vector<16x512xf32> -> vector<16x512xf32>
    %c0_43 = arith.constant 0 : index
    %c0_44 = arith.constant 0 : index
    %75 = vector.load %arg9[%c0_43, %c0_44] : memref<1x512xf32, #tpu.memory_space<vmem>>, vector<1x512xf32>
    %76 = vector.broadcast %75 : vector<1x512xf32> to vector<16x512xf32>
    %77 = arith.subf %74, %76 : vector<16x512xf32>
    %cst_45 = arith.constant 2.33333325 : f32
    %78 = vector.broadcast %cst_45 : f32 to vector<16x512xf32>
    %79 = arith.mulf %77, %78 : vector<16x512xf32>
    %80 = arith.mulf %79, %79 : vector<16x512xf32>
    %cst_46 = arith.constant 0.000000e+00 : f32
    %81 = vector.broadcast %cst_46 : f32 to vector<16x512xf32>
    %82 = arith.subf %81, %80 : vector<16x512xf32>
    %83 = math.exp %82 : vector<16x512xf32>
    %c0_47 = arith.constant 0 : index
    %c0_48 = arith.constant 0 : index
    %84 = vector.load %arg10[%c0_47, %c0_48] : memref<1x512xf32, #tpu.memory_space<vmem>>, vector<1x512xf32>
    %85 = vector.broadcast %84 : vector<1x512xf32> to vector<16x512xf32>
    %86 = arith.subf %74, %85 : vector<16x512xf32>
    %cst_49 = arith.constant 1.66666663 : f32
    %87 = vector.broadcast %cst_49 : f32 to vector<16x512xf32>
    %88 = arith.mulf %86, %87 : vector<16x512xf32>
    %89 = arith.mulf %88, %88 : vector<16x512xf32>
    %90 = arith.mulf %89, %88 : vector<16x512xf32>
    %cst_50 = arith.constant 0.166666672 : f32
    %91 = vector.broadcast %cst_50 : f32 to vector<16x512xf32>
    %92 = arith.mulf %90, %91 : vector<16x512xf32>
    %cst_51 = arith.constant -3.000000e+00 : f32
    %93 = vector.broadcast %cst_51 : f32 to vector<16x512xf32>
    %94 = arith.mulf %93, %90 : vector<16x512xf32>
    %cst_52 = arith.constant 1.200000e+01 : f32
    %95 = vector.broadcast %cst_52 : f32 to vector<16x512xf32>
    %96 = arith.mulf %95, %89 : vector<16x512xf32>
    %97 = arith.addf %94, %96 : vector<16x512xf32>
    %cst_53 = arith.constant 1.200000e+01 : f32
    %98 = vector.broadcast %cst_53 : f32 to vector<16x512xf32>
    %99 = arith.mulf %98, %88 : vector<16x512xf32>
    %100 = arith.subf %97, %99 : vector<16x512xf32>
    %cst_54 = arith.constant 4.000000e+00 : f32
    %101 = vector.broadcast %cst_54 : f32 to vector<16x512xf32>
    %102 = arith.addf %100, %101 : vector<16x512xf32>
    %cst_55 = arith.constant 0.166666672 : f32
    %103 = vector.broadcast %cst_55 : f32 to vector<16x512xf32>
    %104 = arith.mulf %102, %103 : vector<16x512xf32>
    %cst_56 = arith.constant 3.000000e+00 : f32
    %105 = vector.broadcast %cst_56 : f32 to vector<16x512xf32>
    %106 = arith.mulf %105, %90 : vector<16x512xf32>
    %cst_57 = arith.constant 2.400000e+01 : f32
    %107 = vector.broadcast %cst_57 : f32 to vector<16x512xf32>
    %108 = arith.mulf %107, %89 : vector<16x512xf32>
    %109 = arith.subf %106, %108 : vector<16x512xf32>
    %cst_58 = arith.constant 6.000000e+01 : f32
    %110 = vector.broadcast %cst_58 : f32 to vector<16x512xf32>
    %111 = arith.mulf %110, %88 : vector<16x512xf32>
    %112 = arith.addf %109, %111 : vector<16x512xf32>
    %cst_59 = arith.constant 4.400000e+01 : f32
    %113 = vector.broadcast %cst_59 : f32 to vector<16x512xf32>
    %114 = arith.subf %112, %113 : vector<16x512xf32>
    %cst_60 = arith.constant 0.166666672 : f32
    %115 = vector.broadcast %cst_60 : f32 to vector<16x512xf32>
    %116 = arith.mulf %114, %115 : vector<16x512xf32>
    %cst_61 = arith.constant 4.000000e+00 : f32
    %117 = vector.broadcast %cst_61 : f32 to vector<16x512xf32>
    %118 = arith.subf %117, %88 : vector<16x512xf32>
    %119 = arith.mulf %118, %118 : vector<16x512xf32>
    %120 = arith.mulf %119, %118 : vector<16x512xf32>
    %cst_62 = arith.constant 0.166666672 : f32
    %121 = vector.broadcast %cst_62 : f32 to vector<16x512xf32>
    %122 = arith.mulf %120, %121 : vector<16x512xf32>
    %cst_63 = arith.constant 1.000000e+00 : f32
    %123 = vector.broadcast %cst_63 : f32 to vector<16x512xf32>
    %124 = arith.cmpf olt, %88, %123 : vector<16x512xf32>
    %cst_64 = arith.constant 2.000000e+00 : f32
    %125 = vector.broadcast %cst_64 : f32 to vector<16x512xf32>
    %126 = arith.cmpf olt, %88, %125 : vector<16x512xf32>
    %cst_65 = arith.constant 3.000000e+00 : f32
    %127 = vector.broadcast %cst_65 : f32 to vector<16x512xf32>
    %128 = arith.cmpf olt, %88, %127 : vector<16x512xf32>
    %129 = arith.select %128, %116, %122 : vector<16x512xi1>, vector<16x512xf32>
    %130 = arith.select %126, %104, %129 : vector<16x512xi1>, vector<16x512xf32>
    %131 = arith.select %124, %92, %130 : vector<16x512xi1>, vector<16x512xf32>
    %cst_66 = arith.constant 0.000000e+00 : f32
    %132 = vector.broadcast %cst_66 : f32 to vector<16x512xf32>
    %133 = arith.cmpf oge, %88, %132 : vector<16x512xf32>
    %cst_67 = arith.constant 4.000000e+00 : f32
    %134 = vector.broadcast %cst_67 : f32 to vector<16x512xf32>
    %135 = arith.cmpf olt, %88, %134 : vector<16x512xf32>
    %136 = arith.andi %133, %135 : vector<16x512xi1>
    %cst_68 = arith.constant 0.000000e+00 : f32
    %137 = vector.broadcast %cst_68 : f32 to vector<16x512xf32>
    %138 = arith.select %136, %131, %137 : vector<16x512xi1>, vector<16x512xf32>
    %139 = arith.addf %138, %83 : vector<16x512xf32>
    %cst_69 = arith.constant 0.000000e+00 : f32
    %140 = vector.broadcast %cst_69 : f32 to vector<16x64xf32>
    %141 = arith.maximumf %72, %140 : vector<16x64xf32>
    %142 = tpu.concatenate %139, %141 in 1 : vector<16x512xf32>, vector<16x64xf32> -> vector<16x576xf32>
    %c0_70 = arith.constant 0 : index
    %c0_71 = arith.constant 0 : index
    %143 = vector.load %arg11[%c0_70, %c0_71] : memref<576x64xf32, #tpu.memory_space<vmem>>, vector<576x64xf32>
    %cst_72 = arith.constant dense<0.000000e+00> : vector<16x64xf32>
    %144 = tpu.matmul %142, %143, %cst_72 {dimension_numbers = #tpu.dot_dimension_numbers<[1], [0], [0], [1], [0, 0, 1, 1], [], []>} : vector<16x576xf32>, vector<576x64xf32>, vector<16x64xf32> -> vector<16x64xf32>
    %145 = arith.addf %56, %144 : vector<16x64xf32>
    %cst_73 = arith.constant 0.000000e+00 : f32
    %146 = vector.broadcast %cst_73 : f32 to vector<16x64xf32>
    %147 = arith.maximumf %145, %146 : vector<16x64xf32>
    %c0_74 = arith.constant 0 : index
    %c0_75 = arith.constant 0 : index
    %c0_76 = arith.constant 0 : index
    %148 = vector.load %arg12[%c0_74, %c0_75, %c0_76] : memref<1x16x64xf32, #tpu.memory_space<vmem>>, vector<1x16x64xf32>
    %149 = vector.shape_cast %148 : vector<1x16x64xf32> to vector<16x64xf32>
    %150 = vector.shape_cast %147 : vector<16x64xf32> to vector<1x16x64xf32>
    tpu.vector_store %arg12[%c0_74, %c0_75, %c0_76], %150 {strides = array<i32>} : memref<1x16x64xf32, #tpu.memory_space<vmem>>, vector<1x16x64xf32>,
    return
  }
  func.func @transform_0(%arg0: i32) -> (i32, i32, i32) {
    %c0_i32 = arith.constant 0 : i32
    %c0_i32_0 = arith.constant 0 : i32
    %c0_i32_1 = arith.constant 0 : i32
    return %arg0, %c0_i32, %c0_i32_0 : i32, i32, i32
  }
  func.func @transform_1(%arg0: i32) -> (i32, i32, i32) {
    %c0_i32 = arith.constant 0 : i32
    %c0_i32_0 = arith.constant 0 : i32
    %c0_i32_1 = arith.constant 0 : i32
    %c0_i32_2 = arith.constant 0 : i32
    return %c0_i32, %c0_i32_0, %c0_i32_1 : i32, i32, i32
  }
  func.func @transform_2(%arg0: i32) -> (i32, i32) {
    %c0_i32 = arith.constant 0 : i32
    %c0_i32_0 = arith.constant 0 : i32
    %c0_i32_1 = arith.constant 0 : i32
    return %c0_i32, %c0_i32_0 : i32, i32
  }
  func.func @transform_3(%arg0: i32) -> (i32, i32) {
    %c0_i32 = arith.constant 0 : i32
    %c0_i32_0 = arith.constant 0 : i32
    %c0_i32_1 = arith.constant 0 : i32
    return %c0_i32, %c0_i32_0 : i32, i32
  }
  func.func @transform_4(%arg0: i32) -> (i32, i32) {
    %c0_i32 = arith.constant 0 : i32
    %c0_i32_0 = arith.constant 0 : i32
    %c0_i32_1 = arith.constant 0 : i32
    return %c0_i32, %c0_i32_0 : i32, i32
  }
  func.func @transform_5(%arg0: i32) -> (i32, i32) {
    %c0_i32 = arith.constant 0 : i32
    %c0_i32_0 = arith.constant 0 : i32
    %c0_i32_1 = arith.constant 0 : i32
    return %c0_i32, %c0_i32_0 : i32, i32
  }
  func.func @transform_6(%arg0: i32) -> (i32, i32) {
    %c0_i32 = arith.constant 0 : i32
    %c0_i32_0 = arith.constant 0 : i32
    %c0_i32_1 = arith.constant 0 : i32
    return %c0_i32, %c0_i32_0 : i32, i32
  }
  func.func @transform_7(%arg0: i32) -> (i32, i32) {
    %c0_i32 = arith.constant 0 : i32
    %c0_i32_0 = arith.constant 0 : i32
    %c0_i32_1 = arith.constant 0 : i32
    return %c0_i32, %c0_i32_0 : i32, i32
  }
  func.func @transform_8(%arg0: i32) -> (i32, i32) {
    %c0_i32 = arith.constant 0 : i32
    %c0_i32_0 = arith.constant 0 : i32
    %c0_i32_1 = arith.constant 0 : i32
    return %c0_i32, %c0_i32_0 : i32, i32
  }
  func.func @transform_9(%arg0: i32) -> (i32, i32) {
    %c0_i32 = arith.constant 0 : i32
    %c0_i32_0 = arith.constant 0 : i32
    %c0_i32_1 = arith.constant 0 : i32
    return %c0_i32, %c0_i32_0 : i32, i32
  }
  func.func @transform_10(%arg0: i32) -> (i32, i32) {
    %c0_i32 = arith.constant 0 : i32
    %c0_i32_0 = arith.constant 0 : i32
    %c0_i32_1 = arith.constant 0 : i32
    return %c0_i32, %c0_i32_0 : i32, i32
  }
  func.func @transform_11(%arg0: i32) -> (i32, i32, i32) {
    %c0_i32 = arith.constant 0 : i32
    %c0_i32_0 = arith.constant 0 : i32
    %c0_i32_1 = arith.constant 0 : i32
    return %arg0, %c0_i32, %c0_i32_0 : i32, i32, i32
  }
}

</mosaic_0001>

<llo_original>
// kernel: tpu_custom_call.1
$region0: #{tpu_custom_call.1}
  #allocation0 [shape = 'u32[]', space=smem, size = 0x4, offset = 0x4, fixed_abs, tag = 'smem constant byte address 0x4 - core index']
  #allocation1 [shape = 'u32[144,128]{1,0:T(1,128)}', space=vmem, size = 0x12000, scoped, tag = 'internal scratch']
  %s0 = inlined_call_operand.vmem [shape: f32[2,20,80], index: 0, kind: input, shape index: {}]
  %s1 = inlined_call_operand.vmem [shape: f32[3,80,64], index: 1, kind: input, shape index: {}]
  %s2 = inlined_call_operand.vmem [shape: f32[64,64], index: 2, kind: input, shape index: {}]
  %s3 = inlined_call_operand.vmem [shape: f32[64,64], index: 3, kind: input, shape index: {}]
  %s4 = inlined_call_operand.vmem [shape: f32[64,64], index: 4, kind: input, shape index: {}]
  %s5 = inlined_call_operand.vmem [shape: f32[1,64], index: 5, kind: input, shape index: {}]
  %s6 = inlined_call_operand.vmem [shape: f32[1,64], index: 6, kind: input, shape index: {}]
  %s7 = inlined_call_operand.vmem [shape: f32[64,512], index: 7, kind: input, shape index: {}]
  %s8 = inlined_call_operand.vmem [shape: f32[1,512], index: 8, kind: input, shape index: {}]
  %s9 = inlined_call_operand.vmem [shape: f32[1,512], index: 9, kind: input, shape index: {}]
  %s10 = inlined_call_operand.vmem [shape: f32[576,64], index: 10, kind: input, shape index: {}]
  %s11 = inlined_call_operand.hbm [shape: f32[2,16,64], index: 11, kind: output, shape index: {}]
  %s12 = sld [smem:[#allocation0]]
  $region77: #{tpu_custom_call.1} parent=0
    _
  %s14 = ssub.s32 1, %s12
  %s15 = scalar_select 0, %s14, %s12
  $region1: #{tpu_custom_call.1} parent=0
    #allocation2 [shape = 'u8[16384]{0}', space=vmem, size = 0x4000, scoped, tag = 'output window, operand 0']
    #allocation3 [shape = 's32[2]{0}', space=sflag, size = 0x8, scoped, tag = 'scoped memory for tpu_custom_call.1']
    %16 = vsyncpa [#allocation3], 0
    %s17 = scalar_lea.sflag [#allocation3], 1
    %18 = vsyncpa %s17, 0
    loop: start=0, step=1, limit=4
    $region2: #{tpu_custom_call.1} parent=1 // loop_pre_header
      _
    $region3: #{tpu_custom_call.1} parent=1 // loop_header
      %s20 = sphi 0, %s24
      %p21 = scmp.ge.s32.totalorder %s20, 4
      %s30 = sphi 0, %s32
      %s33 = sphi 0, %s30
      %s34 = sphi 0, %s33
      %s50 = sphi 0, %s34
      %s54 = sphi 0, %s54
      %s56 = sphi 0, %s54
      %s57 = sphi 0, %s56
      %s71 = sphi 0, %s57
      %s75 = sphi 0, %s75
      %s77 = sphi 0, %s75
      %s78 = sphi 0, %s77
      %s92 = sphi 0, %s78
      %s96 = sphi 0, %s96
      %s98 = sphi 0, %s96
      %s99 = sphi 0, %s98
      %s113 = sphi 0, %s99
      %s117 = sphi 0, %s117
      %s119 = sphi 0, %s117
      %s120 = sphi 0, %s119
      %s134 = sphi 0, %s120
      %s138 = sphi 0, %s138
      %s140 = sphi 0, %s138
      %s141 = sphi 0, %s140
      %s155 = sphi 0, %s141
      %s159 = sphi 0, %s159
      %s161 = sphi 0, %s159
      %s162 = sphi 0, %s161
      %s176 = sphi 0, %s162
      %s180 = sphi 0, %s180
      %s182 = sphi 0, %s180
      %s183 = sphi 0, %s182
      %s197 = sphi 0, %s183
      %s201 = sphi 0, %s201
      %s203 = sphi 0, %s201
      %s204 = sphi 0, %s203
      %s218 = sphi 0, %s204
      %s222 = sphi 0, %s222
      %s224 = sphi 0, %s222
      %s225 = sphi 0, %s224
      %s239 = sphi 0, %s225
      %s243 = sphi 0, %s243
      %s245 = sphi 0, %s243
      %s246 = sphi 0, %s245
      %s260 = sphi 0, %s246
      %s266 = sphi 0, %s268
      %s269 = sphi 0, %s266
      %s270 = sphi 0, %s269
      %s286 = sphi 0, %s270
    $region4: #{tpu_custom_call.1} parent=1 // loop_header_branch
      %23 = sbr.rel (%p21) target = $region8
    $region5: #{tpu_custom_call.1} parent=1 // loop_body
      %s25 = ssub.s32 %s20, 1
      %s26 = ssub.s32 %s20, 2
      %s27 = sadd.s32 %s20, 1
      %s28 = ssub.s32 %s20, %s27
      %p29 = scmp.eq.s32.totalorder %s28, 0
      %s31 = sadd.s32 %s30, 1
      %s32 = scalar_select %p29, %s30, %s31
      %p35 = pneg %p29
      %p36 = scmp.eq.s32.totalorder %s20, 1
      %p37 = por %p35, %p36
      %p38 = scmp.ne.s32.totalorder %s30, %s33
      %p39 = scmp.eq.s32.totalorder %s20, 0
      %p40 = por %p38, %p39
      %p41 = scmp.ne.s32.totalorder %s30, %s33
      %p42 = scmp.eq.s32.totalorder %s25, 1
      %p43 = por %p41, %p42
      %p44 = scmp.ne.s32.totalorder %s33, %s34
      %p45 = scmp.eq.s32.totalorder %s25, 0
      %p46 = por %p44, %p45
      %p47 = scmp.ne.s32.totalorder %s33, %s34
      %p48 = scmp.eq.s32.totalorder %s26, 1
      %p49 = por %p47, %p48
      %p51 = scmp.ne.s32.totalorder %s34, %s50
      %p52 = scmp.eq.s32.totalorder %s26, 0
      %p53 = por %p51, %p52
      %s55 = sadd.s32 %s54, 1
      %p58 = scmp.eq.s32.totalorder %s20, 1
      %p59 = scmp.ne.s32.totalorder %s54, %s56
      %p60 = scmp.eq.s32.totalorder %s20, 0
      %p61 = por %p59, %p60
      %p62 = scmp.ne.s32.totalorder %s54, %s56
      %p63 = scmp.eq.s32.totalorder %s25, 1
      %p64 = por %p62, %p63
      %p65 = scmp.ne.s32.totalorder %s56, %s57
      %p66 = scmp.eq.s32.totalorder %s25, 0
      %p67 = por %p65, %p66
      %p68 = scmp.ne.s32.totalorder %s56, %s57
      %p69 = scmp.eq.s32.totalorder %s26, 1
      %p70 = por %p68, %p69
      %p72 = scmp.ne.s32.totalorder %s57, %s71
      %p73 = scmp.eq.s32.totalorder %s26, 0
      %p74 = por %p72, %p73
      %s76 = sadd.s32 %s75, 1
      %p79 = scmp.eq.s32.totalorder %s20, 1
      %p80 = scmp.ne.s32.totalorder %s75, %s77
      %p81 = scmp.eq.s32.totalorder %s20, 0
      %p82 = por %p80, %p81
      %p83 = scmp.ne.s32.totalorder %s75, %s77
      %p84 = scmp.eq.s32.totalorder %s25, 1
      %p85 = por %p83, %p84
      %p86 = scmp.ne.s32.totalorder %s77, %s78
      %p87 = scmp.eq.s32.totalorder %s25, 0
      %p88 = por %p86, %p87
      %p89 = scmp.ne.s32.totalorder %s77, %s78
      %p90 = scmp.eq.s32.totalorder %s26, 1
      %p91 = por %p89, %p90
      %p93 = scmp.ne.s32.totalorder %s78, %s92
      %p94 = scmp.eq.s32.totalorder %s26, 0
      %p95 = por %p93, %p94
      %s97 = sadd.s32 %s96, 1
      %p100 = scmp.eq.s32.totalorder %s20, 1
      %p101 = scmp.ne.s32.totalorder %s96, %s98
      %p102 = scmp.eq.s32.totalorder %s20, 0
      %p103 = por %p101, %p102
      %p104 = scmp.ne.s32.totalorder %s96, %s98
      %p105 = scmp.eq.s32.totalorder %s25, 1
      %p106 = por %p104, %p105
      %p107 = scmp.ne.s32.totalorder %s98, %s99
      %p108 = scmp.eq.s32.totalorder %s25, 0
      %p109 = por %p107, %p108
      %p110 = scmp.ne.s32.totalorder %s98, %s99
      %p111 = scmp.eq.s32.totalorder %s26, 1
      %p112 = por %p110, %p111
      %p114 = scmp.ne.s32.totalorder %s99, %s113
      %p115 = scmp.eq.s32.totalorder %s26, 0
      %p116 = por %p114, %p115
      %s118 = sadd.s32 %s117, 1
      %p121 = scmp.eq.s32.totalorder %s20, 1
      %p122 = scmp.ne.s32.totalorder %s117, %s119
      %p123 = scmp.eq.s32.totalorder %s20, 0
      %p124 = por %p122, %p123
      %p125 = scmp.ne.s32.totalorder %s117, %s119
      %p126 = scmp.eq.s32.totalorder %s25, 1
      %p127 = por %p125, %p126
      %p128 = scmp.ne.s32.totalorder %s119, %s120
      %p129 = scmp.eq.s32.totalorder %s25, 0
      %p130 = por %p128, %p129
      %p131 = scmp.ne.s32.totalorder %s119, %s120
      %p132 = scmp.eq.s32.totalorder %s26, 1
      %p133 = por %p131, %p132
      %p135 = scmp.ne.s32.totalorder %s120, %s134
      %p136 = scmp.eq.s32.totalorder %s26, 0
      %p137 = por %p135, %p136
      %s139 = sadd.s32 %s138, 1
      %p142 = scmp.eq.s32.totalorder %s20, 1
      %p143 = scmp.ne.s32.totalorder %s138, %s140
      %p144 = scmp.eq.s32.totalorder %s20, 0
      %p145 = por %p143, %p144
      %p146 = scmp.ne.s32.totalorder %s138, %s140
      %p147 = scmp.eq.s32.totalorder %s25, 1
      %p148 = por %p146, %p147
      %p149 = scmp.ne.s32.totalorder %s140, %s141
      %p150 = scmp.eq.s32.totalorder %s25, 0
      %p151 = por %p149, %p150
      %p152 = scmp.ne.s32.totalorder %s140, %s141
      %p153 = scmp.eq.s32.totalorder %s26, 1
      %p154 = por %p152, %p153
      %p156 = scmp.ne.s32.totalorder %s141, %s155
      %p157 = scmp.eq.s32.totalorder %s26, 0
      %p158 = por %p156, %p157
      %s160 = sadd.s32 %s159, 1
      %p163 = scmp.eq.s32.totalorder %s20, 1
      %p164 = scmp.ne.s32.totalorder %s159, %s161
      %p165 = scmp.eq.s32.totalorder %s20, 0
      %p166 = por %p164, %p165
      %p167 = scmp.ne.s32.totalorder %s159, %s161
      %p168 = scmp.eq.s32.totalorder %s25, 1
      %p169 = por %p167, %p168
      %p170 = scmp.ne.s32.totalorder %s161, %s162
      %p171 = scmp.eq.s32.totalorder %s25, 0
      %p172 = por %p170, %p171
      %p173 = scmp.ne.s32.totalorder %s161, %s162
      %p174 = scmp.eq.s32.totalorder %s26, 1
      %p175 = por %p173, %p174
      %p177 = scmp.ne.s32.totalorder %s162, %s176
      %p178 = scmp.eq.s32.totalorder %s26, 0
      %p179 = por %p177, %p178
      %s181 = sadd.s32 %s180, 1
      %p184 = scmp.eq.s32.totalorder %s20, 1
      %p185 = scmp.ne.s32.totalorder %s180, %s182
      %p186 = scmp.eq.s32.totalorder %s20, 0
      %p187 = por %p185, %p186
      %p188 = scmp.ne.s32.totalorder %s180, %s182
      %p189 = scmp.eq.s32.totalorder %s25, 1
      %p190 = por %p188, %p189
      %p191 = scmp.ne.s32.totalorder %s182, %s183
      %p192 = scmp.eq.s32.totalorder %s25, 0
      %p193 = por %p191, %p192
      %p194 = scmp.ne.s32.totalorder %s182, %s183
      %p195 = scmp.eq.s32.totalorder %s26, 1
      %p196 = por %p194, %p195
      %p198 = scmp.ne.s32.totalorder %s183, %s197
      %p199 = scmp.eq.s32.totalorder %s26, 0
      %p200 = por %p198, %p199
      %s202 = sadd.s32 %s201, 1
      %p205 = scmp.eq.s32.totalorder %s20, 1
      %p206 = scmp.ne.s32.totalorder %s201, %s203
      %p207 = scmp.eq.s32.totalorder %s20, 0
      %p208 = por %p206, %p207
      %p209 = scmp.ne.s32.totalorder %s201, %s203
      %p210 = scmp.eq.s32.totalorder %s25, 1
      %p211 = por %p209, %p210
      %p212 = scmp.ne.s32.totalorder %s203, %s204
      %p213 = scmp.eq.s32.totalorder %s25, 0
      %p214 = por %p212, %p213
      %p215 = scmp.ne.s32.totalorder %s203, %s204
      %p216 = scmp.eq.s32.totalorder %s26, 1
      %p217 = por %p215, %p216
      %p219 = scmp.ne.s32.totalorder %s204, %s218
      %p220 = scmp.eq.s32.totalorder %s26, 0
      %p221 = por %p219, %p220
      %s223 = sadd.s32 %s222, 1
      %p226 = scmp.eq.s32.totalorder %s20, 1
      %p227 = scmp.ne.s32.totalorder %s222, %s224
      %p228 = scmp.eq.s32.totalorder %s20, 0
      %p229 = por %p227, %p228
      %p230 = scmp.ne.s32.totalorder %s222, %s224
      %p231 = scmp.eq.s32.totalorder %s25, 1
      %p232 = por %p230, %p231
      %p233 = scmp.ne.s32.totalorder %s224, %s225
      %p234 = scmp.eq.s32.totalorder %s25, 0
      %p235 = por %p233, %p234
      %p236 = scmp.ne.s32.totalorder %s224, %s225
      %p237 = scmp.eq.s32.totalorder %s26, 1
      %p238 = por %p236, %p237
      %p240 = scmp.ne.s32.totalorder %s225, %s239
      %p241 = scmp.eq.s32.totalorder %s26, 0
      %p242 = por %p240, %p241
      %s244 = sadd.s32 %s243, 1
      %p247 = scmp.eq.s32.totalorder %s20, 1
      %p248 = scmp.ne.s32.totalorder %s243, %s245
      %p249 = scmp.eq.s32.totalorder %s20, 0
      %p250 = por %p248, %p249
      %p251 = scmp.ne.s32.totalorder %s243, %s245
      %p252 = scmp.eq.s32.totalorder %s25, 1
      %p253 = por %p251, %p252
      %p254 = scmp.ne.s32.totalorder %s245, %s246
      %p255 = scmp.eq.s32.totalorder %s25, 0
      %p256 = por %p254, %p255
      %p257 = scmp.ne.s32.totalorder %s245, %s246
      %p258 = scmp.eq.s32.totalorder %s26, 1
      %p259 = por %p257, %p258
      %p261 = scmp.ne.s32.totalorder %s246, %s260
      %p262 = scmp.eq.s32.totalorder %s26, 0
      %p263 = por %p261, %p262
      %s264 = ssub.s32 %s20, %s27
      %p265 = scmp.eq.s32.totalorder %s264, 0
      %s267 = sadd.s32 %s266, 1
      %s268 = scalar_select %p265, %s266, %s267
      %p271 = pneg %p265
      %p272 = scmp.eq.s32.totalorder %s20, 1
      %p273 = por %p271, %p272
      %p274 = scmp.ne.s32.totalorder %s266, %s269
      %p275 = scmp.eq.s32.totalorder %s20, 0
      %p276 = por %p274, %p275
      %p277 = scmp.ne.s32.totalorder %s266, %s269
      %p278 = scmp.eq.s32.totalorder %s25, 1
      %p279 = por %p277, %p278
      %p280 = scmp.ne.s32.totalorder %s269, %s270
      %p281 = scmp.eq.s32.totalorder %s25, 0
      %p282 = por %p280, %p281
      %p283 = scmp.ne.s32.totalorder %s269, %s270
      %p284 = scmp.eq.s32.totalorder %s26, 1
      %p285 = por %p283, %p284
      %p287 = scmp.ne.s32.totalorder %s270, %s286
      %p288 = scmp.eq.s32.totalorder %s26, 0
      %p289 = por %p287, %p288
      %p290 = scmp.le.s32.totalorder 1, %s20
      %p291 = scmp.lt.s32.totalorder %s20, 3
      %p292 = pnand %p290, %p291
      %p293 = pneg %p292
      // Predicated region
      $region9: #{tpu_custom_call.1} parent=5 // pred_check
        _
      $region10: #{tpu_custom_call.1} parent=5 // pred_check_branch
        %295 = sbr.rel (%p292) target = $region12
      $region11: #{tpu_custom_call.1} parent=5 // pred_region
        %s296 = ssub.s32 %s20, 1
        // Predicated region
        $region13: #{tpu_custom_call.1} parent=11 // pred_check
          %p297 = pneg %p67
        $region14: #{tpu_custom_call.1} parent=11 // pred_check_branch
          %299 = sbr.rel (%p297) target = $region16
        $region15: #{tpu_custom_call.1} parent=11 // pred_region
          _
        $region16: #{tpu_custom_call.1} parent=11 // pred_fallthru
          _
        // Predicated region
        $region17: #{tpu_custom_call.1} parent=11 // pred_check
          %p300 = pneg %p88
        $region18: #{tpu_custom_call.1} parent=11 // pred_check_branch
          %302 = sbr.rel (%p300) target = $region20
        $region19: #{tpu_custom_call.1} parent=11 // pred_region
          _
        $region20: #{tpu_custom_call.1} parent=11 // pred_fallthru
          _
        // Predicated region
        $region21: #{tpu_custom_call.1} parent=11 // pred_check
          %p303 = pneg %p109
        $region22: #{tpu_custom_call.1} parent=11 // pred_check_branch
          %305 = sbr.rel (%p303) target = $region24
        $region23: #{tpu_custom_call.1} parent=11 // pred_region
          _
        $region24: #{tpu_custom_call.1} parent=11 // pred_fallthru
          _
        // Predicated region
        $region25: #{tpu_custom_call.1} parent=11 // pred_check
          %p306 = pneg %p130
        $region26: #{tpu_custom_call.1} parent=11 // pred_check_branch
          %308 = sbr.rel (%p306) target = $region28
        $region27: #{tpu_custom_call.1} parent=11 // pred_region
          _
        $region28: #{tpu_custom_call.1} parent=11 // pred_fallthru
          _
        // Predicated region
        $region29: #{tpu_custom_call.1} parent=11 // pred_check
          %p309 = pneg %p151
        $region30: #{tpu_custom_call.1} parent=11 // pred_check_branch
          %311 = sbr.rel (%p309) target = $region32
        $region31: #{tpu_custom_call.1} parent=11 // pred_region
          _
        $region32: #{tpu_custom_call.1} parent=11 // pred_fallthru
          _
        // Predicated region
        $region33: #{tpu_custom_call.1} parent=11 // pred_check
          %p312 = pneg %p172
        $region34: #{tpu_custom_call.1} parent=11 // pred_check_branch
          %314 = sbr.rel (%p312) target = $region36
        $region35: #{tpu_custom_call.1} parent=11 // pred_region
          _
        $region36: #{tpu_custom_call.1} parent=11 // pred_fallthru
          _
        // Predicated region
        $region37: #{tpu_custom_call.1} parent=11 // pred_check
          %p315 = pneg %p193
        $region38: #{tpu_custom_call.1} parent=11 // pred_check_branch
          %317 = sbr.rel (%p315) target = $region40
        $region39: #{tpu_custom_call.1} parent=11 // pred_region
          _
        $region40: #{tpu_custom_call.1} parent=11 // pred_fallthru
          _
        // Predicated region
        $region41: #{tpu_custom_call.1} parent=11 // pred_check
          %p318 = pneg %p214
        $region42: #{tpu_custom_call.1} parent=11 // pred_check_branch
          %320 = sbr.rel (%p318) target = $region44
        $region43: #{tpu_custom_call.1} parent=11 // pred_region
          _
        $region44: #{tpu_custom_call.1} parent=11 // pred_fallthru
          _
        // Predicated region
        $region45: #{tpu_custom_call.1} parent=11 // pred_check
          %p321 = pneg %p235
        $region46: #{tpu_custom_call.1} parent=11 // pred_check_branch
          %323 = sbr.rel (%p321) target = $region48
        $region47: #{tpu_custom_call.1} parent=11 // pred_region
          _
        $region48: #{tpu_custom_call.1} parent=11 // pred_fallthru
          _
        // Predicated region
        $region49: #{tpu_custom_call.1} parent=11 // pred_check
          %p324 = pneg %p256
        $region50: #{tpu_custom_call.1} parent=11 // pred_check_branch
          %326 = sbr.rel (%p324) target = $region52
        $region51: #{tpu_custom_call.1} parent=11 // pred_region
          _
        $region52: #{tpu_custom_call.1} parent=11 // pred_fallthru
          _
      $region12: #{tpu_custom_call.1} parent=5 // pred_fallthru
        _
      %p327 = scmp.lt.s32.totalorder %s20, 2
      // Predicated region
      $region53: #{tpu_custom_call.1} parent=5 // pred_check
        %p328 = pneg %p327
      $region54: #{tpu_custom_call.1} parent=5 // pred_check_branch
        %330 = sbr.rel (%p328) target = $region56
      $region55: #{tpu_custom_call.1} parent=5 // pred_region
        // Predicated region
        $region57: #{tpu_custom_call.1} parent=55 // pred_check
          %p331 = pneg %p40
        $region58: #{tpu_custom_call.1} parent=55 // pred_check_branch
          %333 = sbr.rel (%p331) target = $region60
        $region59: #{tpu_custom_call.1} parent=55 // pred_region
          %p334 = scmp.lt.s32.totalorder %s20, 1
          %s335 = scalar_select %p334, %s20, 1
          %s336 = smul.addr %s335, 3
          %s337 = smul.addr %s336, 8
          %s338 = scalar_lea.vmem %s0, %s337
        $region60: #{tpu_custom_call.1} parent=55 // pred_fallthru
          _
      $region56: #{tpu_custom_call.1} parent=5 // pred_fallthru
        _
      %p339 = scmp.le.s32.totalorder 1, %s20
      %p340 = scmp.lt.s32.totalorder %s20, 3
      %p341 = pnand %p339, %p340
      %p342 = pneg %p341
      // Predicated region
      $region61: #{tpu_custom_call.1} parent=5 // pred_check
        _
      $region62: #{tpu_custom_call.1} parent=5 // pred_check_branch
        %344 = sbr.rel (%p341) target = $region64
      $region63: #{tpu_custom_call.1} parent=5 // pred_region
        %s345 = ssub.s32 %s20, 1
        %p346 = scmp.lt.s32.totalorder %s25, 1
        %s347 = scalar_select %p346, %s25, 1
        %s348 = smul.addr %s347, 3
        %s349 = smul.addr %s348, 8
        %s350 = scalar_lea.vmem %s0, %s349
        %p351 = pneg %p46
        %p352 = pneg %p43
        %p353 = pneg %p67
        %p354 = pneg %p64
        %p355 = pneg %p88
        %p356 = pneg %p85
        %p357 = pneg %p109
        %p358 = pneg %p106
        %p359 = pneg %p130
        %p360 = pneg %p127
        %p361 = pneg %p151
        %p362 = pneg %p148
        %p363 = pneg %p172
        %p364 = pneg %p169
        %p365 = pneg %p193
        %p366 = pneg %p190
        %p367 = pneg %p214
        %p368 = pneg %p211
        %p369 = pneg %p235
        %p370 = pneg %p232
        %p371 = pneg %p256
        %p372 = pneg %p253
        %p373 = pneg %p282
        %p374 = pneg %p279
        %s375 = sand.u32 %s269, 1
        %s376 = scalar_lea.sflag [#allocation3], %s375
        %s377 = sand.u32 %s269, 1
        %s378 = smul.addr %s377, 16
        %s379 = scalar_lea.vmem [#allocation2], %s378
        %p380 = scmp.lt.s32.totalorder %s25, 1
        %s381 = scalar_select %p380, %s25, 1
        %s382 = smul.addr %s381, 3
        %s383 = smul.addr %s382, 8
        %s384 = scalar_lea.vmem %s0, %s383
        %v385 = vld [vmem:[%s384] sm:$0xff]
        %v386 = vld [vmem:[%s384 + $0x8] sm:$0xff]
        %v387 = vld [vmem:[%s384 + $0x10] sm:$0xf]
        %v388 = vld [vmem:[%s1] sm:$0xff]
        %v389 = vld [vmem:[%s1 + $0x8] sm:$0xff]
        %v390 = vld [vmem:[%s1 + $0x10] sm:$0xff]
        %v391 = vld [vmem:[%s1 + $0x18] sm:$0xff]
        %v392 = vld [vmem:[%s1 + $0x20] sm:$0xff]
        %v393 = vld [vmem:[%s1 + $0x28] sm:$0xff]
        %v394 = vld [vmem:[%s1 + $0x30] sm:$0xff]
        %v395 = vld [vmem:[%s1 + $0x38] sm:$0xff]
        %v396 = vld [vmem:[%s1 + $0x40] sm:$0xff]
        %v397 = vld [vmem:[%s1 + $0x48] sm:$0xff]
        %s398 = scalar_lea.vmem %s1, 80
        %v399 = vld [vmem:[%s398] sm:$0xff]
        %v400 = vld [vmem:[%s398 + $0x8] sm:$0xff]
        %v401 = vld [vmem:[%s398 + $0x10] sm:$0xff]
        %v402 = vld [vmem:[%s398 + $0x18] sm:$0xff]
        %v403 = vld [vmem:[%s398 + $0x20] sm:$0xff]
        %v404 = vld [vmem:[%s398 + $0x28] sm:$0xff]
        %v405 = vld [vmem:[%s398 + $0x30] sm:$0xff]
        %v406 = vld [vmem:[%s398 + $0x38] sm:$0xff]
        %v407 = vld [vmem:[%s398 + $0x40] sm:$0xff]
        %v408 = vld [vmem:[%s398 + $0x48] sm:$0xff]
        %vm412 = vcmask 1045504
        %v413 = vrot.slane %v385, 2
        %v414 = vrot.slane %v386, 2
        %v415 = vsel %vm412, %v413, %v414
        %v416 = vrot.slane %v387, 2
        %v417 = vsel %vm412, %v414, %v416
        %vm418 = vcmask 654336
        %v419 = vsel %vm418, %v415, 0
        %v421 = vsel %vm418, %v417, 0
        %423 = vmatprep.subr.mxu0 0.0
        %424 = vmatpush1.msra.mxu0 %v399
        %425 = vmatprep.subr.mxu0 0.0
        %426 = vmatpush1.msra.mxu0 %v400
        %427 = vmatprep.subr.mxu0 0.0
        %428 = vmatpush1.msra.mxu0 %v401
        %429 = vmatprep.subr.mxu0 0.0
        %430 = vmatpush1.msra.mxu0 %v402
        %431 = vmatprep.subr.mxu0 0.0
        %432 = vmatpush1.msra.mxu0 %v403
        %433 = vmatprep.subr.mxu0 0.0
        %434 = vmatpush1.msra.mxu0 %v404
        %435 = vmatprep.subr.mxu0 0.0
        %436 = vmatpush1.msra.mxu0 %v405
        %437 = vmatprep.subr.mxu0 0.0
        %438 = vmatpush1.msra.mxu0 %v406
        %439 = vmatprep.subr.mxu0 0.0
        %440 = vmatpush1.msra.mxu0 %v407
        %441 = vmatprep.subr.mxu0 0.0
        %442 = vmatpush1.msra.mxu0 %v408
        %443 = vmatprep.subr.mxu0 0.0
        %444 = vmatpush1.msra.mxu0 0.0
        %445 = vmatprep.subr.mxu0 0.0
        %446 = vmatpush1.msra.mxu0 0.0
        %447 = vmatprep.subr.mxu0 0.0
        %448 = vmatpush1.msra.mxu0 0.0
        %449 = vmatprep.subr.mxu0 0.0
        %450 = vmatpush1.msra.mxu0 0.0
        %451 = vmatprep.subr.mxu0 0.0
        %452 = vmatpush1.msra.mxu0 0.0
        %453 = vmatprep.subr.mxu0 0.0
        %454 = vmatpush1.msra.mxu0 0.0
        %455 = vmatprep.subr.mxu0 0.0
        %456 = vmatpush1.msra.mxu0 0.0
        %457 = vmatprep.subr.mxu0 0.0
        %458 = vmatpush1.msra.mxu0 0.0
        %459 = vmatprep.subr.mxu0 0.0
        %460 = vmatpush1.msra.mxu0 0.0
        %461 = vmatprep.subr.mxu0 0.0
        %462 = vmatpush1.msra.mxu0 0.0
        %463 = vmatprep.subr.mxu0 0.0
        %464 = vmatpush1.msra.mxu0 0.0
        %465 = vmatprep.subr.mxu0 0.0
        %466 = vmatpush1.msra.mxu0 0.0
        %467 = vmatprep.subr.mxu0 0.0
        %468 = vmatpush1.msra.mxu0 0.0
        %469 = vmatprep.subr.mxu0 0.0
        %470 = vmatpush1.msra.mxu0 0.0
        %471 = vmatprep.subr.mxu0 0.0
        %472 = vmatpush1.msra.mxu0 0.0
        %473 = vmatprep.subr.mxu0 0.0
        %474 = vmatpush1.msra.mxu0 0.0
        %475 = vmatprep.subr.mxu0 0.0
        %476 = vmatpush1.msra.mxu0 0.0
        %477 = vmatprep.subr.mxu0 0.0
        %478 = vmatpush1.msra.mxu0 0.0
        %479 = vmatprep.subr.mxu0 0.0
        %480 = vmatpush1.msra.mxu0 0.0
        %481 = vmatprep.subr.mxu0 0.0
        %482 = vmatpush1.msra.mxu0 0.0
        %483 = vmatprep.subr.mxu0 0.0
        %484 = vmatpush1.msra.mxu0 0.0
        %485 = vmatprep.subr.mxu0 0.0
        %486 = vmatpush1.msra.mxu0 0.0
        %487 = vmatprep.mubr.f32.mxu0 0.0
        %488 = vmatmul.mubr.f32.gmra.mrb[0].mxu0 %v419
        %v489 = vpop.f32.mrb[0].mxu0
        %v490 = vadd.f32 0.0, %v489
        %v491 = vpop.f32.mrb[0].mxu0
        %492 = vmatprep.mubr.f32.mxu0 0.0
        %493 = vmatmul.mubr.f32.gmra.mrb[0].mxu0 %v421
        %v494 = vpop.f32.mrb[0].mxu0
        %v495 = vadd.f32 0.0, %v494
        %v496 = vpop.f32.mrb[0].mxu0
        %497 = vdwg.mxu0
        %v498 = vsel %vm418, %v385, 0
        %v500 = vsel %vm418, %v386, 0
        %502 = vmatprep.subr.mxu0 0.0
        %503 = vmatpush1.msra.mxu0 %v388
        %504 = vmatprep.subr.mxu0 0.0
        %505 = vmatpush1.msra.mxu0 %v389
        %506 = vmatprep.subr.mxu0 0.0
        %507 = vmatpush1.msra.mxu0 %v390
        %508 = vmatprep.subr.mxu0 0.0
        %509 = vmatpush1.msra.mxu0 %v391
        %510 = vmatprep.subr.mxu0 0.0
        %511 = vmatpush1.msra.mxu0 %v392
        %512 = vmatprep.subr.mxu0 0.0
        %513 = vmatpush1.msra.mxu0 %v393
        %514 = vmatprep.subr.mxu0 0.0
        %515 = vmatpush1.msra.mxu0 %v394
        %516 = vmatprep.subr.mxu0 0.0
        %517 = vmatpush1.msra.mxu0 %v395
        %518 = vmatprep.subr.mxu0 0.0
        %519 = vmatpush1.msra.mxu0 %v396
        %520 = vmatprep.subr.mxu0 0.0
        %521 = vmatpush1.msra.mxu0 %v397
        %522 = vmatprep.subr.mxu0 0.0
        %523 = vmatpush1.msra.mxu0 0.0
        %524 = vmatprep.subr.mxu0 0.0
        %525 = vmatpush1.msra.mxu0 0.0
        %526 = vmatprep.subr.mxu0 0.0
        %527 = vmatpush1.msra.mxu0 0.0
        %528 = vmatprep.subr.mxu0 0.0
        %529 = vmatpush1.msra.mxu0 0.0
        %530 = vmatprep.subr.mxu0 0.0
        %531 = vmatpush1.msra.mxu0 0.0
        %532 = vmatprep.subr.mxu0 0.0
        %533 = vmatpush1.msra.mxu0 0.0
        %534 = vmatprep.subr.mxu0 0.0
        %535 = vmatpush1.msra.mxu0 0.0
        %536 = vmatprep.subr.mxu0 0.0
        %537 = vmatpush1.msra.mxu0 0.0
        %538 = vmatprep.subr.mxu0 0.0
        %539 = vmatpush1.msra.mxu0 0.0
        %540 = vmatprep.subr.mxu0 0.0
        %541 = vmatpush1.msra.mxu0 0.0
        %542 = vmatprep.subr.mxu0 0.0
        %543 = vmatpush1.msra.mxu0 0.0
        %544 = vmatprep.subr.mxu0 0.0
        %545 = vmatpush1.msra.mxu0 0.0
        %546 = vmatprep.subr.mxu0 0.0
        %547 = vmatpush1.msra.mxu0 0.0
        %548 = vmatprep.subr.mxu0 0.0
        %549 = vmatpush1.msra.mxu0 0.0
        %550 = vmatprep.subr.mxu0 0.0
        %551 = vmatpush1.msra.mxu0 0.0
        %552 = vmatprep.subr.mxu0 0.0
        %553 = vmatpush1.msra.mxu0 0.0
        %554 = vmatprep.subr.mxu0 0.0
        %555 = vmatpush1.msra.mxu0 0.0
        %556 = vmatprep.subr.mxu0 0.0
        %557 = vmatpush1.msra.mxu0 0.0
        %558 = vmatprep.subr.mxu0 0.0
        %559 = vmatpush1.msra.mxu0 0.0
        %560 = vmatprep.subr.mxu0 0.0
        %561 = vmatpush1.msra.mxu0 0.0
        %562 = vmatprep.subr.mxu0 0.0
        %563 = vmatpush1.msra.mxu0 0.0
        %564 = vmatprep.subr.mxu0 0.0
        %565 = vmatpush1.msra.mxu0 0.0
        %566 = vmatprep.mubr.f32.mxu0 0.0
        %567 = vmatmul.mubr.f32.gmra.mrb[0].mxu0 %v498
        %v568 = vpop.f32.mrb[0].mxu0
        %v569 = vadd.f32 %v490, %v568
        %v570 = vpop.f32.mrb[0].mxu0
        %571 = vmatprep.mubr.f32.mxu0 0.0
        %572 = vmatmul.mubr.f32.gmra.mrb[0].mxu0 %v500
        %v573 = vpop.f32.mrb[0].mxu0
        %v574 = vadd.f32 %v495, %v573
        %v575 = vpop.f32.mrb[0].mxu0
        %576 = vdwg.mxu0
        %s577 = scalar_lea.vmem %s1, 160
        %v578 = vld [vmem:[%s577] sm:$0xff]
        %v579 = vld [vmem:[%s577 + $0x8] sm:$0xff]
        %v580 = vld [vmem:[%s577 + $0x10] sm:$0xff]
        %v581 = vld [vmem:[%s577 + $0x18] sm:$0xff]
        %v582 = vld [vmem:[%s577 + $0x20] sm:$0xff]
        %v583 = vld [vmem:[%s577 + $0x28] sm:$0xff]
        %v584 = vld [vmem:[%s577 + $0x30] sm:$0xff]
        %v585 = vld [vmem:[%s577 + $0x38] sm:$0xff]
        %v586 = vld [vmem:[%s577 + $0x40] sm:$0xff]
        %v587 = vld [vmem:[%s577 + $0x48] sm:$0xff]
        %vm588 = vcmask 1043456
        %v589 = vrot.slane %v385, 4
        %v590 = vrot.slane %v386, 4
        %v591 = vsel %vm588, %v589, %v590
        %v592 = vrot.slane %v387, 4
        %v593 = vsel %vm588, %v590, %v592
        %v594 = vsel %vm418, %v591, 0
        %v596 = vsel %vm418, %v593, 0
        %598 = vmatprep.subr.mxu0 0.0
        %599 = vmatpush1.msra.mxu0 %v578
        %600 = vmatprep.subr.mxu0 0.0
        %601 = vmatpush1.msra.mxu0 %v579
        %602 = vmatprep.subr.mxu0 0.0
        %603 = vmatpush1.msra.mxu0 %v580
        %604 = vmatprep.subr.mxu0 0.0
        %605 = vmatpush1.msra.mxu0 %v581
        %606 = vmatprep.subr.mxu0 0.0
        %607 = vmatpush1.msra.mxu0 %v582
        %608 = vmatprep.subr.mxu0 0.0
        %609 = vmatpush1.msra.mxu0 %v583
        %610 = vmatprep.subr.mxu0 0.0
        %611 = vmatpush1.msra.mxu0 %v584
        %612 = vmatprep.subr.mxu0 0.0
        %613 = vmatpush1.msra.mxu0 %v585
        %614 = vmatprep.subr.mxu0 0.0
        %615 = vmatpush1.msra.mxu0 %v586
        %616 = vmatprep.subr.mxu0 0.0
        %617 = vmatpush1.msra.mxu0 %v587
        %618 = vmatprep.subr.mxu0 0.0
        %619 = vmatpush1.msra.mxu0 0.0
        %620 = vmatprep.subr.mxu0 0.0
        %621 = vmatpush1.msra.mxu0 0.0
        %622 = vmatprep.subr.mxu0 0.0
        %623 = vmatpush1.msra.mxu0 0.0
        %624 = vmatprep.subr.mxu0 0.0
        %625 = vmatpush1.msra.mxu0 0.0
        %626 = vmatprep.subr.mxu0 0.0
        %627 = vmatpush1.msra.mxu0 0.0
        %628 = vmatprep.subr.mxu0 0.0
        %629 = vmatpush1.msra.mxu0 0.0
        %630 = vmatprep.subr.mxu0 0.0
        %631 = vmatpush1.msra.mxu0 0.0
        %632 = vmatprep.subr.mxu0 0.0
        %633 = vmatpush1.msra.mxu0 0.0
        %634 = vmatprep.subr.mxu0 0.0
        %635 = vmatpush1.msra.mxu0 0.0
        %636 = vmatprep.subr.mxu0 0.0
        %637 = vmatpush1.msra.mxu0 0.0
        %638 = vmatprep.subr.mxu0 0.0
        %639 = vmatpush1.msra.mxu0 0.0
        %640 = vmatprep.subr.mxu0 0.0
        %641 = vmatpush1.msra.mxu0 0.0
        %642 = vmatprep.subr.mxu0 0.0
        %643 = vmatpush1.msra.mxu0 0.0
        %644 = vmatprep.subr.mxu0 0.0
        %645 = vmatpush1.msra.mxu0 0.0
        %646 = vmatprep.subr.mxu0 0.0
        %647 = vmatpush1.msra.mxu0 0.0
        %648 = vmatprep.subr.mxu0 0.0
        %649 = vmatpush1.msra.mxu0 0.0
        %650 = vmatprep.subr.mxu0 0.0
        %651 = vmatpush1.msra.mxu0 0.0
        %652 = vmatprep.subr.mxu0 0.0
        %653 = vmatpush1.msra.mxu0 0.0
        %654 = vmatprep.subr.mxu0 0.0
        %655 = vmatpush1.msra.mxu0 0.0
        %656 = vmatprep.subr.mxu0 0.0
        %657 = vmatpush1.msra.mxu0 0.0
        %658 = vmatprep.subr.mxu0 0.0
        %659 = vmatpush1.msra.mxu0 0.0
        %660 = vmatprep.subr.mxu0 0.0
        %661 = vmatpush1.msra.mxu0 0.0
        %662 = vmatprep.mubr.f32.mxu0 0.0
        %663 = vmatmul.mubr.f32.gmra.mrb[0].mxu0 %v594
        %v664 = vpop.f32.mrb[0].mxu0
        %v665 = vadd.f32 0.0, %v664
        %v666 = vpop.f32.mrb[0].mxu0
        %667 = vmatprep.mubr.f32.mxu0 0.0
        %668 = vmatmul.mubr.f32.gmra.mrb[0].mxu0 %v596
        %v669 = vpop.f32.mrb[0].mxu0
        %v670 = vadd.f32 0.0, %v669
        %v671 = vpop.f32.mrb[0].mxu0
        %672 = vdwg.mxu0
        %v673 = vadd.f32 %v569, %v665
        %v674 = vadd.f32 %v574, %v670
        %v675 = vld [vmem:[%s3] sm:$0xff]
        %v676 = vld [vmem:[%s3 + $0x8] sm:$0xff]
        %v677 = vld [vmem:[%s3 + $0x10] sm:$0xff]
        %v678 = vld [vmem:[%s3 + $0x18] sm:$0xff]
        %v679 = vld [vmem:[%s3 + $0x20] sm:$0xff]
        %v680 = vld [vmem:[%s3 + $0x28] sm:$0xff]
        %v681 = vld [vmem:[%s3 + $0x30] sm:$0xff]
        %v682 = vld [vmem:[%s3 + $0x38] sm:$0xff]
        %vm683 = vcmask 523264
        %v684 = vsel %vm683, %v673, 0.0
        %v685 = vsel %vm683, %v674, 0.0
        %v686 = vadd.f32 %v684, %v685
        %v687 = vrot.slane %v686, 4
        %v688 = vadd.f32 %v686, %v687
        %v689 = vrot.slane %v688, 2
        %v690 = vadd.f32 %v688, %v689
        %v691 = vrot.slane %v690, 1
        %v692 = vadd.f32 %v690, %v691
        %v694 = vsel %vm683, %v692, 0
        %696 = vmatprep.subr.mxu0 0.0
        %697 = vmatpush1.msra.mxu0 %v675
        %698 = vmatprep.subr.mxu0 0.0
        %699 = vmatpush1.msra.mxu0 %v676
        %700 = vmatprep.subr.mxu0 0.0
        %701 = vmatpush1.msra.mxu0 %v677
        %702 = vmatprep.subr.mxu0 0.0
        %703 = vmatpush1.msra.mxu0 %v678
        %704 = vmatprep.subr.mxu0 0.0
        %705 = vmatpush1.msra.mxu0 %v679
        %706 = vmatprep.subr.mxu0 0.0
        %707 = vmatpush1.msra.mxu0 %v680
        %708 = vmatprep.subr.mxu0 0.0
        %709 = vmatpush1.msra.mxu0 %v681
        %710 = vmatprep.subr.mxu0 0.0
        %711 = vmatpush1.msra.mxu0 %v682
        %712 = vmatprep.subr.mxu0 0.0
        %713 = vmatpush1.msra.mxu0 0.0
        %714 = vmatprep.subr.mxu0 0.0
        %715 = vmatpush1.msra.mxu0 0.0
        %716 = vmatprep.subr.mxu0 0.0
        %717 = vmatpush1.msra.mxu0 0.0
        %718 = vmatprep.subr.mxu0 0.0
        %719 = vmatpush1.msra.mxu0 0.0
        %720 = vmatprep.subr.mxu0 0.0
        %721 = vmatpush1.msra.mxu0 0.0
        %722 = vmatprep.subr.mxu0 0.0
        %723 = vmatpush1.msra.mxu0 0.0
        %724 = vmatprep.subr.mxu0 0.0
        %725 = vmatpush1.msra.mxu0 0.0
        %726 = vmatprep.subr.mxu0 0.0
        %727 = vmatpush1.msra.mxu0 0.0
        %728 = vmatprep.subr.mxu0 0.0
        %729 = vmatpush1.msra.mxu0 0.0
        %730 = vmatprep.subr.mxu0 0.0
        %731 = vmatpush1.msra.mxu0 0.0
        %732 = vmatprep.subr.mxu0 0.0
        %733 = vmatpush1.msra.mxu0 0.0
        %734 = vmatprep.subr.mxu0 0.0
        %735 = vmatpush1.msra.mxu0 0.0
        %736 = vmatprep.subr.mxu0 0.0
        %737 = vmatpush1.msra.mxu0 0.0
        %738 = vmatprep.subr.mxu0 0.0
        %739 = vmatpush1.msra.mxu0 0.0
        %740 = vmatprep.subr.mxu0 0.0
        %741 = vmatpush1.msra.mxu0 0.0
        %742 = vmatprep.subr.mxu0 0.0
        %743 = vmatpush1.msra.mxu0 0.0
        %744 = vmatprep.subr.mxu0 0.0
        %745 = vmatpush1.msra.mxu0 0.0
        %746 = vmatprep.subr.mxu0 0.0
        %747 = vmatpush1.msra.mxu0 0.0
        %748 = vmatprep.subr.mxu0 0.0
        %749 = vmatpush1.msra.mxu0 0.0
        %750 = vmatprep.subr.mxu0 0.0
        %751 = vmatpush1.msra.mxu0 0.0
        %752 = vmatprep.subr.mxu0 0.0
        %753 = vmatpush1.msra.mxu0 0.0
        %754 = vmatprep.subr.mxu0 0.0
        %755 = vmatpush1.msra.mxu0 0.0
        %756 = vmatprep.subr.mxu0 0.0
        %757 = vmatpush1.msra.mxu0 0.0
        %758 = vmatprep.subr.mxu0 0.0
        %759 = vmatpush1.msra.mxu0 0.0
        %760 = vmatprep.mubr.f32.mxu0 0.0
        %761 = vmatmul.mubr.f32.gmra.mrb[0].mxu0 %v694
        %v762 = vpop.f32.mrb[0].mxu0
        %v763 = vadd.f32 0.0, %v762
        %v764 = vpop.f32.mrb[0].mxu0
        %765 = vdwg.mxu0
        %v766 = vmul.f32 %v763, 0.00390625
        %v767 = vlaneseq
        %v768 = vshrl.u32 %v767, 7
        %v769 = vsub.s32 0, %v768
        %v770 = vrot.slane %v766, %v769
        %v771 = vsub.f32 %v673, %v770
        %v772 = vsub.f32 %v674, %v770
        %v773 = vmul.f32 %v771, %v771
        %v774 = vmul.f32 %v772, %v772
        %v775 = vsel %vm683, %v773, 0.0
        %v776 = vsel %vm683, %v774, 0.0
        %v777 = vadd.f32 %v775, %v776
        %v778 = vrot.slane %v777, 4
        %v779 = vadd.f32 %v777, %v778
        %v780 = vrot.slane %v779, 2
        %v781 = vadd.f32 %v779, %v780
        %v782 = vrot.slane %v781, 1
        %v783 = vadd.f32 %v781, %v782
        %v785 = vsel %vm683, %v783, 0
        %787 = vmatprep.subr.mxu0 0.0
        %788 = vmatpush1.msra.mxu0 %v675
        %789 = vmatprep.subr.mxu0 0.0
        %790 = vmatpush1.msra.mxu0 %v676
        %791 = vmatprep.subr.mxu0 0.0
        %792 = vmatpush1.msra.mxu0 %v677
        %793 = vmatprep.subr.mxu0 0.0
        %794 = vmatpush1.msra.mxu0 %v678
        %795 = vmatprep.subr.mxu0 0.0
        %796 = vmatpush1.msra.mxu0 %v679
        %797 = vmatprep.subr.mxu0 0.0
        %798 = vmatpush1.msra.mxu0 %v680
        %799 = vmatprep.subr.mxu0 0.0
        %800 = vmatpush1.msra.mxu0 %v681
        %801 = vmatprep.subr.mxu0 0.0
        %802 = vmatpush1.msra.mxu0 %v682
        %803 = vmatprep.subr.mxu0 0.0
        %804 = vmatpush1.msra.mxu0 0.0
        %805 = vmatprep.subr.mxu0 0.0
        %806 = vmatpush1.msra.mxu0 0.0
        %807 = vmatprep.subr.mxu0 0.0
        %808 = vmatpush1.msra.mxu0 0.0
        %809 = vmatprep.subr.mxu0 0.0
        %810 = vmatpush1.msra.mxu0 0.0
        %811 = vmatprep.subr.mxu0 0.0
        %812 = vmatpush1.msra.mxu0 0.0
        %813 = vmatprep.subr.mxu0 0.0
        %814 = vmatpush1.msra.mxu0 0.0
        %815 = vmatprep.subr.mxu0 0.0
        %816 = vmatpush1.msra.mxu0 0.0
        %817 = vmatprep.subr.mxu0 0.0
        %818 = vmatpush1.msra.mxu0 0.0
        %819 = vmatprep.subr.mxu0 0.0
        %820 = vmatpush1.msra.mxu0 0.0
        %821 = vmatprep.subr.mxu0 0.0
        %822 = vmatpush1.msra.mxu0 0.0
        %823 = vmatprep.subr.mxu0 0.0
        %824 = vmatpush1.msra.mxu0 0.0
        %825 = vmatprep.subr.mxu0 0.0
        %826 = vmatpush1.msra.mxu0 0.0
        %827 = vmatprep.subr.mxu0 0.0
        %828 = vmatpush1.msra.mxu0 0.0
        %829 = vmatprep.subr.mxu0 0.0
        %830 = vmatpush1.msra.mxu0 0.0
        %831 = vmatprep.subr.mxu0 0.0
        %832 = vmatpush1.msra.mxu0 0.0
        %833 = vmatprep.subr.mxu0 0.0
        %834 = vmatpush1.msra.mxu0 0.0
        %835 = vmatprep.subr.mxu0 0.0
        %836 = vmatpush1.msra.mxu0 0.0
        %837 = vmatprep.subr.mxu0 0.0
        %838 = vmatpush1.msra.mxu0 0.0
        %839 = vmatprep.subr.mxu0 0.0
        %840 = vmatpush1.msra.mxu0 0.0
        %841 = vmatprep.subr.mxu0 0.0
        %842 = vmatpush1.msra.mxu0 0.0
        %843 = vmatprep.subr.mxu0 0.0
        %844 = vmatpush1.msra.mxu0 0.0
        %845 = vmatprep.subr.mxu0 0.0
        %846 = vmatpush1.msra.mxu0 0.0
        %847 = vmatprep.subr.mxu0 0.0
        %848 = vmatpush1.msra.mxu0 0.0
        %849 = vmatprep.subr.mxu0 0.0
        %850 = vmatpush1.msra.mxu0 0.0
        %851 = vmatprep.mubr.f32.mxu0 0.0
        %852 = vmatmul.mubr.f32.gmra.mrb[0].mxu0 %v785
        %v853 = vpop.f32.mrb[0].mxu0
        %v854 = vadd.f32 0.0, %v853
        %v855 = vpop.f32.mrb[0].mxu0
        %856 = vdwg.mxu0
        %v857 = vmul.f32 %v854, 0.00390625
        %v858 = vadd.f32 %v857, 1e-05
        %v859 = vrsqrt.pop %v858
        %v860 = vlaneseq
        %v861 = vshrl.u32 %v860, 7
        %v862 = vsub.s32 0, %v861
        %v863 = vrot.slane %v859, %v862
        %v864 = vmul.f32 %v771, %v863
        %v865 = vmul.f32 %v772, %v863
        %v866 = vmax.f32 %v864, 0.0
        %v867 = vmax.f32 %v865, 0.0
        %v868 = vld [vmem:[%s2] sm:$0xff]
        %v869 = vld [vmem:[%s2 + $0x8] sm:$0xff]
        %v870 = vld [vmem:[%s2 + $0x10] sm:$0xff]
        %v871 = vld [vmem:[%s2 + $0x18] sm:$0xff]
        %v872 = vld [vmem:[%s2 + $0x20] sm:$0xff]
        %v873 = vld [vmem:[%s2 + $0x28] sm:$0xff]
        %v874 = vld [vmem:[%s2 + $0x30] sm:$0xff]
        %v875 = vld [vmem:[%s2 + $0x38] sm:$0xff]
        %v877 = vsel %vm683, %v866, 0
        %v880 = vsel %vm683, %v867, 0
        %882 = vmatprep.subr.mxu0 0.0
        %883 = vmatpush1.msra.mxu0 %v868
        %884 = vmatprep.subr.mxu0 0.0
        %885 = vmatpush1.msra.mxu0 %v869
        %886 = vmatprep.subr.mxu0 0.0
        %887 = vmatpush1.msra.mxu0 %v870
        %888 = vmatprep.subr.mxu0 0.0
        %889 = vmatpush1.msra.mxu0 %v871
        %890 = vmatprep.subr.mxu0 0.0
        %891 = vmatpush1.msra.mxu0 %v872
        %892 = vmatprep.subr.mxu0 0.0
        %893 = vmatpush1.msra.mxu0 %v873
        %894 = vmatprep.subr.mxu0 0.0
        %895 = vmatpush1.msra.mxu0 %v874
        %896 = vmatprep.subr.mxu0 0.0
        %897 = vmatpush1.msra.mxu0 %v875
        %898 = vmatprep.subr.mxu0 0.0
        %899 = vmatpush1.msra.mxu0 0.0
        %900 = vmatprep.subr.mxu0 0.0
        %901 = vmatpush1.msra.mxu0 0.0
        %902 = vmatprep.subr.mxu0 0.0
        %903 = vmatpush1.msra.mxu0 0.0
        %904 = vmatprep.subr.mxu0 0.0
        %905 = vmatpush1.msra.mxu0 0.0
        %906 = vmatprep.subr.mxu0 0.0
        %907 = vmatpush1.msra.mxu0 0.0
        %908 = vmatprep.subr.mxu0 0.0
        %909 = vmatpush1.msra.mxu0 0.0
        %910 = vmatprep.subr.mxu0 0.0
        %911 = vmatpush1.msra.mxu0 0.0
        %912 = vmatprep.subr.mxu0 0.0
        %913 = vmatpush1.msra.mxu0 0.0
        %914 = vmatprep.subr.mxu0 0.0
        %915 = vmatpush1.msra.mxu0 0.0
        %916 = vmatprep.subr.mxu0 0.0
        %917 = vmatpush1.msra.mxu0 0.0
        %918 = vmatprep.subr.mxu0 0.0
        %919 = vmatpush1.msra.mxu0 0.0
        %920 = vmatprep.subr.mxu0 0.0
        %921 = vmatpush1.msra.mxu0 0.0
        %922 = vmatprep.subr.mxu0 0.0
        %923 = vmatpush1.msra.mxu0 0.0
        %924 = vmatprep.subr.mxu0 0.0
        %925 = vmatpush1.msra.mxu0 0.0
        %926 = vmatprep.subr.mxu0 0.0
        %927 = vmatpush1.msra.mxu0 0.0
        %928 = vmatprep.subr.mxu0 0.0
        %929 = vmatpush1.msra.mxu0 0.0
        %930 = vmatprep.subr.mxu0 0.0
        %931 = vmatpush1.msra.mxu0 0.0
        %932 = vmatprep.subr.mxu0 0.0
        %933 = vmatpush1.msra.mxu0 0.0
        %934 = vmatprep.subr.mxu0 0.0
        %935 = vmatpush1.msra.mxu0 0.0
        %936 = vmatprep.subr.mxu0 0.0
        %937 = vmatpush1.msra.mxu0 0.0
        %938 = vmatprep.subr.mxu0 0.0
        %939 = vmatpush1.msra.mxu0 0.0
        %940 = vmatprep.subr.mxu0 0.0
        %941 = vmatpush1.msra.mxu0 0.0
        %942 = vmatprep.subr.mxu0 0.0
        %943 = vmatpush1.msra.mxu0 0.0
        %944 = vmatprep.subr.mxu0 0.0
        %945 = vmatpush1.msra.mxu0 0.0
        %946 = vmatprep.mubr.f32.mxu0 0.0
        %947 = vmatmul.mubr.f32.gmra.mrb[0].mxu0 %v877
        %v948 = vpop.f32.mrb[0].mxu0
        %v949 = vadd.f32 0.0, %v948
        %v950 = vpop.f32.mrb[0].mxu0
        %951 = vmatprep.mubr.f32.mxu0 0.0
        %952 = vmatmul.mubr.f32.gmra.mrb[0].mxu0 %v880
        %v953 = vpop.f32.mrb[0].mxu0
        %v954 = vadd.f32 0.0, %v953
        %v955 = vpop.f32.mrb[0].mxu0
        %956 = vdwg.mxu0
        %v957 = vsel %vm683, %v949, 0.0
        %v958 = vsel %vm683, %v954, 0.0
        %v959 = vadd.f32 %v957, %v958
        %v960 = vrot.slane %v959, 4
        %v961 = vadd.f32 %v959, %v960
        %v962 = vrot.slane %v961, 2
        %v963 = vadd.f32 %v961, %v962
        %v964 = vrot.slane %v963, 1
        %v965 = vadd.f32 %v963, %v964
        %v967 = vsel %vm683, %v965, 0
        %969 = vmatprep.subr.mxu0 0.0
        %970 = vmatpush1.msra.mxu0 %v675
        %971 = vmatprep.subr.mxu0 0.0
        %972 = vmatpush1.msra.mxu0 %v676
        %973 = vmatprep.subr.mxu0 0.0
        %974 = vmatpush1.msra.mxu0 %v677
        %975 = vmatprep.subr.mxu0 0.0
        %976 = vmatpush1.msra.mxu0 %v678
        %977 = vmatprep.subr.mxu0 0.0
        %978 = vmatpush1.msra.mxu0 %v679
        %979 = vmatprep.subr.mxu0 0.0
        %980 = vmatpush1.msra.mxu0 %v680
        %981 = vmatprep.subr.mxu0 0.0
        %982 = vmatpush1.msra.mxu0 %v681
        %983 = vmatprep.subr.mxu0 0.0
        %984 = vmatpush1.msra.mxu0 %v682
        %985 = vmatprep.subr.mxu0 0.0
        %986 = vmatpush1.msra.mxu0 0.0
        %987 = vmatprep.subr.mxu0 0.0
        %988 = vmatpush1.msra.mxu0 0.0
        %989 = vmatprep.subr.mxu0 0.0
        %990 = vmatpush1.msra.mxu0 0.0
        %991 = vmatprep.subr.mxu0 0.0
        %992 = vmatpush1.msra.mxu0 0.0
        %993 = vmatprep.subr.mxu0 0.0
        %994 = vmatpush1.msra.mxu0 0.0
        %995 = vmatprep.subr.mxu0 0.0
        %996 = vmatpush1.msra.mxu0 0.0
        %997 = vmatprep.subr.mxu0 0.0
        %998 = vmatpush1.msra.mxu0 0.0
        %999 = vmatprep.subr.mxu0 0.0
        %1000 = vmatpush1.msra.mxu0 0.0
        %1001 = vmatprep.subr.mxu0 0.0
        %1002 = vmatpush1.msra.mxu0 0.0
        %1003 = vmatprep.subr.mxu0 0.0
        %1004 = vmatpush1.msra.mxu0 0.0
        %1005 = vmatprep.subr.mxu0 0.0
        %1006 = vmatpush1.msra.mxu0 0.0
        %1007 = vmatprep.subr.mxu0 0.0
        %1008 = vmatpush1.msra.mxu0 0.0
        %1009 = vmatprep.subr.mxu0 0.0
        %1010 = vmatpush1.msra.mxu0 0.0
        %1011 = vmatprep.subr.mxu0 0.0
        %1012 = vmatpush1.msra.mxu0 0.0
        %1013 = vmatprep.subr.mxu0 0.0
        %1014 = vmatpush1.msra.mxu0 0.0
        %1015 = vmatprep.subr.mxu0 0.0
        %1016 = vmatpush1.msra.mxu0 0.0
        %1017 = vmatprep.subr.mxu0 0.0
        %1018 = vmatpush1.msra.mxu0 0.0
        %1019 = vmatprep.subr.mxu0 0.0
        %1020 = vmatpush1.msra.mxu0 0.0
        %1021 = vmatprep.subr.mxu0 0.0
        %1022 = vmatpush1.msra.mxu0 0.0
        %1023 = vmatprep.subr.mxu0 0.0
        %1024 = vmatpush1.msra.mxu0 0.0
        %1025 = vmatprep.subr.mxu0 0.0
        %1026 = vmatpush1.msra.mxu0 0.0
        %1027 = vmatprep.subr.mxu0 0.0
        %1028 = vmatpush1.msra.mxu0 0.0
        %1029 = vmatprep.subr.mxu0 0.0
        %1030 = vmatpush1.msra.mxu0 0.0
        %1031 = vmatprep.subr.mxu0 0.0
        %1032 = vmatpush1.msra.mxu0 0.0
        %1033 = vmatprep.mubr.f32.mxu0 0.0
        %1034 = vmatmul.mubr.f32.gmra.mrb[0].mxu0 %v967
        %v1035 = vpop.f32.mrb[0].mxu0
        %v1036 = vadd.f32 0.0, %v1035
        %v1037 = vpop.f32.mrb[0].mxu0
        %1038 = vdwg.mxu0
        %v1039 = vmul.f32 %v1036, 0.00390625
        %v1040 = vlaneseq
        %v1041 = vshrl.u32 %v1040, 7
        %v1042 = vsub.s32 0, %v1041
        %v1043 = vrot.slane %v1039, %v1042
        %v1044 = vsub.f32 %v949, %v1043
        %v1045 = vsub.f32 %v954, %v1043
        %v1046 = vmul.f32 %v1044, %v1044
        %v1047 = vmul.f32 %v1045, %v1045
        %v1048 = vsel %vm683, %v1046, 0.0
        %v1049 = vsel %vm683, %v1047, 0.0
        %v1050 = vadd.f32 %v1048, %v1049
        %v1051 = vrot.slane %v1050, 4
        %v1052 = vadd.f32 %v1050, %v1051
        %v1053 = vrot.slane %v1052, 2
        %v1054 = vadd.f32 %v1052, %v1053
        %v1055 = vrot.slane %v1054, 1
        %v1056 = vadd.f32 %v1054, %v1055
        %v1058 = vsel %vm683, %v1056, 0
        %1060 = vmatprep.subr.mxu0 0.0
        %1061 = vmatpush1.msra.mxu0 %v675
        %1062 = vmatprep.subr.mxu0 0.0
        %1063 = vmatpush1.msra.mxu0 %v676
        %1064 = vmatprep.subr.mxu0 0.0
        %1065 = vmatpush1.msra.mxu0 %v677
        %1066 = vmatprep.subr.mxu0 0.0
        %1067 = vmatpush1.msra.mxu0 %v678
        %1068 = vmatprep.subr.mxu0 0.0
        %1069 = vmatpush1.msra.mxu0 %v679
        %1070 = vmatprep.subr.mxu0 0.0
        %1071 = vmatpush1.msra.mxu0 %v680
        %1072 = vmatprep.subr.mxu0 0.0
        %1073 = vmatpush1.msra.mxu0 %v681
        %1074 = vmatprep.subr.mxu0 0.0
        %1075 = vmatpush1.msra.mxu0 %v682
        %1076 = vmatprep.subr.mxu0 0.0
        %1077 = vmatpush1.msra.mxu0 0.0
        %1078 = vmatprep.subr.mxu0 0.0
        %1079 = vmatpush1.msra.mxu0 0.0
        %1080 = vmatprep.subr.mxu0 0.0
        %1081 = vmatpush1.msra.mxu0 0.0
        %1082 = vmatprep.subr.mxu0 0.0
        %1083 = vmatpush1.msra.mxu0 0.0
        %1084 = vmatprep.subr.mxu0 0.0
        %1085 = vmatpush1.msra.mxu0 0.0
        %1086 = vmatprep.subr.mxu0 0.0
        %1087 = vmatpush1.msra.mxu0 0.0
        %1088 = vmatprep.subr.mxu0 0.0
        %1089 = vmatpush1.msra.mxu0 0.0
        %1090 = vmatprep.subr.mxu0 0.0
        %1091 = vmatpush1.msra.mxu0 0.0
        %1092 = vmatprep.subr.mxu0 0.0
        %1093 = vmatpush1.msra.mxu0 0.0
        %1094 = vmatprep.subr.mxu0 0.0
        %1095 = vmatpush1.msra.mxu0 0.0
        %1096 = vmatprep.subr.mxu0 0.0
        %1097 = vmatpush1.msra.mxu0 0.0
        %1098 = vmatprep.subr.mxu0 0.0
        %1099 = vmatpush1.msra.mxu0 0.0
        %1100 = vmatprep.subr.mxu0 0.0
        %1101 = vmatpush1.msra.mxu0 0.0
        %1102 = vmatprep.subr.mxu0 0.0
        %1103 = vmatpush1.msra.mxu0 0.0
        %1104 = vmatprep.subr.mxu0 0.0
        %1105 = vmatpush1.msra.mxu0 0.0
        %1106 = vmatprep.subr.mxu0 0.0
        %1107 = vmatpush1.msra.mxu0 0.0
        %1108 = vmatprep.subr.mxu0 0.0
        %1109 = vmatpush1.msra.mxu0 0.0
        %1110 = vmatprep.subr.mxu0 0.0
        %1111 = vmatpush1.msra.mxu0 0.0
        %1112 = vmatprep.subr.mxu0 0.0
        %1113 = vmatpush1.msra.mxu0 0.0
        %1114 = vmatprep.subr.mxu0 0.0
        %1115 = vmatpush1.msra.mxu0 0.0
        %1116 = vmatprep.subr.mxu0 0.0
        %1117 = vmatpush1.msra.mxu0 0.0
        %1118 = vmatprep.subr.mxu0 0.0
        %1119 = vmatpush1.msra.mxu0 0.0
        %1120 = vmatprep.subr.mxu0 0.0
        %1121 = vmatpush1.msra.mxu0 0.0
        %1122 = vmatprep.subr.mxu0 0.0
        %1123 = vmatpush1.msra.mxu0 0.0
        %1124 = vmatprep.mubr.f32.mxu0 0.0
        %1125 = vmatmul.mubr.f32.gmra.mrb[0].mxu0 %v1058
        %v1126 = vpop.f32.mrb[0].mxu0
        %v1127 = vadd.f32 0.0, %v1126
        %v1128 = vpop.f32.mrb[0].mxu0
        %1129 = vdwg.mxu0
        %v1130 = vmul.f32 %v1127, 0.00390625
        %v1131 = vadd.f32 %v1130, 1e-05
        %v1132 = vrsqrt.pop %v1131
        %v1133 = vlaneseq
        %v1134 = vshrl.u32 %v1133, 7
        %v1135 = vsub.s32 0, %v1134
        %v1136 = vrot.slane %v1132, %v1135
        %v1137 = vmul.f32 %v1044, %v1136
        %v1138 = vmul.f32 %v1045, %v1136
        %v1139 = vld [vmem:[%s4] sm:$0xff]
        %v1140 = vld [vmem:[%s4 + $0x8] sm:$0xff]
        %v1141 = vld [vmem:[%s4 + $0x10] sm:$0xff]
        %v1142 = vld [vmem:[%s4 + $0x18] sm:$0xff]
        %v1143 = vld [vmem:[%s4 + $0x20] sm:$0xff]
        %v1144 = vld [vmem:[%s4 + $0x28] sm:$0xff]
        %v1145 = vld [vmem:[%s4 + $0x30] sm:$0xff]
        %v1146 = vld [vmem:[%s4 + $0x38] sm:$0xff]
        %1147 = vrot.lane.b32.xlu0 %v415, 120
        %v1148 = vpop.permute.xlu0 %1147
        %1149 = vrot.lane.b32.xlu0 %v417, 120
        %v1150 = vpop.permute.xlu0 %1149
        %v1151 = vsel %vm683, %v1148, 0
        %v1153 = vsel %vm683, %v1150, 0
        %1155 = vmatprep.subr.mxu0 0.0
        %1156 = vmatpush1.msra.mxu0 %v1139
        %1157 = vmatprep.subr.mxu0 0.0
        %1158 = vmatpush1.msra.mxu0 %v1140
        %1159 = vmatprep.subr.mxu0 0.0
        %1160 = vmatpush1.msra.mxu0 %v1141
        %1161 = vmatprep.subr.mxu0 0.0
        %1162 = vmatpush1.msra.mxu0 %v1142
        %1163 = vmatprep.subr.mxu0 0.0
        %1164 = vmatpush1.msra.mxu0 %v1143
        %1165 = vmatprep.subr.mxu0 0.0
        %1166 = vmatpush1.msra.mxu0 %v1144
        %1167 = vmatprep.subr.mxu0 0.0
        %1168 = vmatpush1.msra.mxu0 %v1145
        %1169 = vmatprep.subr.mxu0 0.0
        %1170 = vmatpush1.msra.mxu0 %v1146
        %1171 = vmatprep.subr.mxu0 0.0
        %1172 = vmatpush1.msra.mxu0 0.0
        %1173 = vmatprep.subr.mxu0 0.0
        %1174 = vmatpush1.msra.mxu0 0.0
        %1175 = vmatprep.subr.mxu0 0.0
        %1176 = vmatpush1.msra.mxu0 0.0
        %1177 = vmatprep.subr.mxu0 0.0
        %1178 = vmatpush1.msra.mxu0 0.0
        %1179 = vmatprep.subr.mxu0 0.0
        %1180 = vmatpush1.msra.mxu0 0.0
        %1181 = vmatprep.subr.mxu0 0.0
        %1182 = vmatpush1.msra.mxu0 0.0
        %1183 = vmatprep.subr.mxu0 0.0
        %1184 = vmatpush1.msra.mxu0 0.0
        %1185 = vmatprep.subr.mxu0 0.0
        %1186 = vmatpush1.msra.mxu0 0.0
        %1187 = vmatprep.subr.mxu0 0.0
        %1188 = vmatpush1.msra.mxu0 0.0
        %1189 = vmatprep.subr.mxu0 0.0
        %1190 = vmatpush1.msra.mxu0 0.0
        %1191 = vmatprep.subr.mxu0 0.0
        %1192 = vmatpush1.msra.mxu0 0.0
        %1193 = vmatprep.subr.mxu0 0.0
        %1194 = vmatpush1.msra.mxu0 0.0
        %1195 = vmatprep.subr.mxu0 0.0
        %1196 = vmatpush1.msra.mxu0 0.0
        %1197 = vmatprep.subr.mxu0 0.0
        %1198 = vmatpush1.msra.mxu0 0.0
        %1199 = vmatprep.subr.mxu0 0.0
        %1200 = vmatpush1.msra.mxu0 0.0
        %1201 = vmatprep.subr.mxu0 0.0
        %1202 = vmatpush1.msra.mxu0 0.0
        %1203 = vmatprep.subr.mxu0 0.0
        %1204 = vmatpush1.msra.mxu0 0.0
        %1205 = vmatprep.subr.mxu0 0.0
        %1206 = vmatpush1.msra.mxu0 0.0
        %1207 = vmatprep.subr.mxu0 0.0
        %1208 = vmatpush1.msra.mxu0 0.0
        %1209 = vmatprep.subr.mxu0 0.0
        %1210 = vmatpush1.msra.mxu0 0.0
        %1211 = vmatprep.subr.mxu0 0.0
        %1212 = vmatpush1.msra.mxu0 0.0
        %1213 = vmatprep.subr.mxu0 0.0
        %1214 = vmatpush1.msra.mxu0 0.0
        %1215 = vmatprep.subr.mxu0 0.0
        %1216 = vmatpush1.msra.mxu0 0.0
        %1217 = vmatprep.subr.mxu0 0.0
        %1218 = vmatpush1.msra.mxu0 0.0
        %1219 = vmatprep.mubr.f32.mxu0 0.0
        %1220 = vmatmul.mubr.f32.gmra.mrb[0].mxu0 %v1151
        %v1221 = vpop.f32.mrb[0].mxu0
        %v1222 = vadd.f32 0.0, %v1221
        %v1223 = vpop.f32.mrb[0].mxu0
        %1224 = vmatprep.mubr.f32.mxu0 0.0
        %1225 = vmatmul.mubr.f32.gmra.mrb[0].mxu0 %v1153
        %v1226 = vpop.f32.mrb[0].mxu0
        %v1227 = vadd.f32 0.0, %v1226
        %v1228 = vpop.f32.mrb[0].mxu0
        %1229 = vdwg.mxu0
        %vm1232 = vcmask 1041408
        %v1233 = vrot.slane %v1222, 6
        %v1234 = vrot.slane %v1227, 6
        %v1235 = vsel %vm1232, %v1233, %v1234
        %1236 = vrot.lane.b32.xlu0 %v1233, 8
        %v1237 = vpop.permute.xlu0 %1236
        %1238 = vrot.lane.b32.xlu0 %v1235, 8
        %v1239 = vpop.permute.xlu0 %1238
        %1240 = vrot.lane.b32.xlu0 %v1234, 8
        %v1241 = vpop.permute.xlu0 %1240
        %v1245 = vsub.f32 %v385, %v1237
        %v1246 = vsub.f32 %v386, %v1239
        %v1247 = vsub.f32 %v387, %v1241
        %v1248 = vmul.f32 %v1245, %v1245
        %v1249 = vmul.f32 %v1246, %v1246
        %v1250 = vmul.f32 %v1247, %v1247
        %v1254 = vrot.slane %v1248, 2
        %v1255 = vrot.slane %v1249, 2
        %v1256 = vsel %vm412, %v1254, %v1255
        %v1257 = vrot.slane %v1250, 2
        %v1258 = vsel %vm412, %v1255, %v1257
        %1259 = vrot.lane.b32.xlu0 %v1256, 120
        %v1260 = vpop.permute.xlu0 %1259
        %1261 = vrot.lane.b32.xlu0 %v1258, 120
        %v1262 = vpop.permute.xlu0 %1261
        %v1263 = vsel %vm683, %v1260, 0
        %v1265 = vsel %vm683, %v1262, 0
        %1267 = vmatprep.subr.mxu0 0.0
        %1268 = vmatpush1.msra.mxu0 %v1139
        %1269 = vmatprep.subr.mxu0 0.0
        %1270 = vmatpush1.msra.mxu0 %v1140
        %1271 = vmatprep.subr.mxu0 0.0
        %1272 = vmatpush1.msra.mxu0 %v1141
        %1273 = vmatprep.subr.mxu0 0.0
        %1274 = vmatpush1.msra.mxu0 %v1142
        %1275 = vmatprep.subr.mxu0 0.0
        %1276 = vmatpush1.msra.mxu0 %v1143
        %1277 = vmatprep.subr.mxu0 0.0
        %1278 = vmatpush1.msra.mxu0 %v1144
        %1279 = vmatprep.subr.mxu0 0.0
        %1280 = vmatpush1.msra.mxu0 %v1145
        %1281 = vmatprep.subr.mxu0 0.0
        %1282 = vmatpush1.msra.mxu0 %v1146
        %1283 = vmatprep.subr.mxu0 0.0
        %1284 = vmatpush1.msra.mxu0 0.0
        %1285 = vmatprep.subr.mxu0 0.0
        %1286 = vmatpush1.msra.mxu0 0.0
        %1287 = vmatprep.subr.mxu0 0.0
        %1288 = vmatpush1.msra.mxu0 0.0
        %1289 = vmatprep.subr.mxu0 0.0
        %1290 = vmatpush1.msra.mxu0 0.0
        %1291 = vmatprep.subr.mxu0 0.0
        %1292 = vmatpush1.msra.mxu0 0.0
        %1293 = vmatprep.subr.mxu0 0.0
        %1294 = vmatpush1.msra.mxu0 0.0
        %1295 = vmatprep.subr.mxu0 0.0
        %1296 = vmatpush1.msra.mxu0 0.0
        %1297 = vmatprep.subr.mxu0 0.0
        %1298 = vmatpush1.msra.mxu0 0.0
        %1299 = vmatprep.subr.mxu0 0.0
        %1300 = vmatpush1.msra.mxu0 0.0
        %1301 = vmatprep.subr.mxu0 0.0
        %1302 = vmatpush1.msra.mxu0 0.0
        %1303 = vmatprep.subr.mxu0 0.0
        %1304 = vmatpush1.msra.mxu0 0.0
        %1305 = vmatprep.subr.mxu0 0.0
        %1306 = vmatpush1.msra.mxu0 0.0
        %1307 = vmatprep.subr.mxu0 0.0
        %1308 = vmatpush1.msra.mxu0 0.0
        %1309 = vmatprep.subr.mxu0 0.0
        %1310 = vmatpush1.msra.mxu0 0.0
        %1311 = vmatprep.subr.mxu0 0.0
        %1312 = vmatpush1.msra.mxu0 0.0
        %1313 = vmatprep.subr.mxu0 0.0
        %1314 = vmatpush1.msra.mxu0 0.0
        %1315 = vmatprep.subr.mxu0 0.0
        %1316 = vmatpush1.msra.mxu0 0.0
        %1317 = vmatprep.subr.mxu0 0.0
        %1318 = vmatpush1.msra.mxu0 0.0
        %1319 = vmatprep.subr.mxu0 0.0
        %1320 = vmatpush1.msra.mxu0 0.0
        %1321 = vmatprep.subr.mxu0 0.0
        %1322 = vmatpush1.msra.mxu0 0.0
        %1323 = vmatprep.subr.mxu0 0.0
        %1324 = vmatpush1.msra.mxu0 0.0
        %1325 = vmatprep.subr.mxu0 0.0
        %1326 = vmatpush1.msra.mxu0 0.0
        %1327 = vmatprep.subr.mxu0 0.0
        %1328 = vmatpush1.msra.mxu0 0.0
        %1329 = vmatprep.subr.mxu0 0.0
        %1330 = vmatpush1.msra.mxu0 0.0
        %1331 = vmatprep.mubr.f32.mxu0 0.0
        %1332 = vmatmul.mubr.f32.gmra.mrb[0].mxu0 %v1263
        %v1333 = vpop.f32.mrb[0].mxu0
        %v1334 = vadd.f32 1e-05, %v1333
        %v1335 = vpop.f32.mrb[0].mxu0
        %1336 = vmatprep.mubr.f32.mxu0 0.0
        %1337 = vmatmul.mubr.f32.gmra.mrb[0].mxu0 %v1265
        %v1338 = vpop.f32.mrb[0].mxu0
        %v1339 = vadd.f32 1e-05, %v1338
        %v1340 = vpop.f32.mrb[0].mxu0
        %1341 = vdwg.mxu0
        %v1342 = vrsqrt.pop %v1334
        %v1343 = vrsqrt.pop %v1339
        %v1346 = vrot.slane %v1342, 6
        %v1347 = vrot.slane %v1343, 6
        %v1348 = vsel %vm1232, %v1346, %v1347
        %1349 = vrot.lane.b32.xlu0 %v1346, 8
        %v1350 = vpop.permute.xlu0 %1349
        %1351 = vrot.lane.b32.xlu0 %v1348, 8
        %v1352 = vpop.permute.xlu0 %1351
        %1353 = vrot.lane.b32.xlu0 %v1347, 8
        %v1354 = vpop.permute.xlu0 %1353
        %v1358 = vmul.f32 %v1245, %v1350
        %v1359 = vmul.f32 %v1246, %v1352
        %v1360 = vmul.f32 %v1247, %v1354
        %v1361 = vld [vmem:[%s5] sm:$0x1]
        %v1363 = vlaneseq
        %v1364 = vshrl.u32 %v1363, 7
        %v1365 = vsub.s32 0, %v1364
        %v1366 = vrot.slane %v1361, %v1365
        %1367 = vrot.lane.b32.xlu0 %v1366, 8
        %v1368 = vpop.permute.xlu0 %1367
        %v1370 = vmul.f32 %v1358, %v1368
        %v1371 = vmul.f32 %v1359, %v1368
        %v1372 = vmul.f32 %v1360, %v1368
        %v1373 = vld [vmem:[%s6] sm:$0x1]
        %v1375 = vlaneseq
        %v1376 = vshrl.u32 %v1375, 7
        %v1377 = vsub.s32 0, %v1376
        %v1378 = vrot.slane %v1373, %v1377
        %1379 = vrot.lane.b32.xlu0 %v1378, 8
        %v1380 = vpop.permute.xlu0 %1379
        %v1382 = vadd.f32 %v1370, %v1380
        %v1383 = vadd.f32 %v1371, %v1380
        %v1384 = vadd.f32 %v1372, %v1380
        %v1385 = vld [vmem:[%s7] sm:$0xff]
        %v1386 = vld [vmem:[%s7 + $0x8] sm:$0xff]
        %v1387 = vld [vmem:[%s7 + $0x10] sm:$0xff]
        %v1388 = vld [vmem:[%s7 + $0x18] sm:$0xff]
        %v1389 = vld [vmem:[%s7 + $0x20] sm:$0xff]
        %v1390 = vld [vmem:[%s7 + $0x28] sm:$0xff]
        %v1391 = vld [vmem:[%s7 + $0x30] sm:$0xff]
        %v1392 = vld [vmem:[%s7 + $0x38] sm:$0xff]
        %v1393 = vld [vmem:[%s7 + $0x40] sm:$0xff]
        %v1394 = vld [vmem:[%s7 + $0x48] sm:$0xff]
        %v1395 = vld [vmem:[%s7 + $0x50] sm:$0xff]
        %v1396 = vld [vmem:[%s7 + $0x58] sm:$0xff]
        %v1397 = vld [vmem:[%s7 + $0x60] sm:$0xff]
        %v1398 = vld [vmem:[%s7 + $0x68] sm:$0xff]
        %v1399 = vld [vmem:[%s7 + $0x70] sm:$0xff]
        %v1400 = vld [vmem:[%s7 + $0x78] sm:$0xff]
        %v1401 = vld [vmem:[%s7 + $0x80] sm:$0xff]
        %v1402 = vld [vmem:[%s7 + $0x88] sm:$0xff]
        %v1403 = vld [vmem:[%s7 + $0x90] sm:$0xff]
        %v1404 = vld [vmem:[%s7 + $0x98] sm:$0xff]
        %v1405 = vld [vmem:[%s7 + $0xa0] sm:$0xff]
        %v1406 = vld [vmem:[%s7 + $0xa8] sm:$0xff]
        %v1407 = vld [vmem:[%s7 + $0xb0] sm:$0xff]
        %v1408 = vld [vmem:[%s7 + $0xb8] sm:$0xff]
        %v1409 = vld [vmem:[%s7 + $0xc0] sm:$0xff]
        %v1410 = vld [vmem:[%s7 + $0xc8] sm:$0xff]
        %v1411 = vld [vmem:[%s7 + $0xd0] sm:$0xff]
        %v1412 = vld [vmem:[%s7 + $0xd8] sm:$0xff]
        %v1413 = vld [vmem:[%s7 + $0xe0] sm:$0xff]
        %v1414 = vld [vmem:[%s7 + $0xe8] sm:$0xff]
        %v1415 = vld [vmem:[%s7 + $0xf0] sm:$0xff]
        %v1416 = vld [vmem:[%s7 + $0xf8] sm:$0xff]
        %v1420 = vrot.slane %v1382, 2
        %v1421 = vrot.slane %v1383, 2
        %v1422 = vsel %vm412, %v1420, %v1421
        %v1423 = vrot.slane %v1384, 2
        %v1424 = vsel %vm412, %v1421, %v1423
        %1425 = vrot.lane.b32.xlu0 %v1422, 120
        %v1426 = vpop.permute.xlu0 %1425
        %1427 = vrot.lane.b32.xlu0 %v1424, 120
        %v1428 = vpop.permute.xlu0 %1427
        %v1429 = vsel %vm683, %v1426, 0
        %v1431 = vsel %vm683, %v1428, 0
        %1433 = vmatprep.subr.mxu0 %v1386
        %1434 = vmatpush1.msra.mxu0 %v1385
        %1435 = vmatprep.subr.mxu0 %v1390
        %1436 = vmatpush1.msra.mxu0 %v1389
        %1437 = vmatprep.subr.mxu0 %v1394
        %1438 = vmatpush1.msra.mxu0 %v1393
        %1439 = vmatprep.subr.mxu0 %v1398
        %1440 = vmatpush1.msra.mxu0 %v1397
        %1441 = vmatprep.subr.mxu0 %v1402
        %1442 = vmatpush1.msra.mxu0 %v1401
        %1443 = vmatprep.subr.mxu0 %v1406
        %1444 = vmatpush1.msra.mxu0 %v1405
        %1445 = vmatprep.subr.mxu0 %v1410
        %1446 = vmatpush1.msra.mxu0 %v1409
        %1447 = vmatprep.subr.mxu0 %v1414
        %1448 = vmatpush1.msra.mxu0 %v1413
        %1449 = vmatprep.subr.mxu0 0.0
        %1450 = vmatpush1.msra.mxu0 0.0
        %1451 = vmatprep.subr.mxu0 0.0
        %1452 = vmatpush1.msra.mxu0 0.0
        %1453 = vmatprep.subr.mxu0 0.0
        %1454 = vmatpush1.msra.mxu0 0.0
        %1455 = vmatprep.subr.mxu0 0.0
        %1456 = vmatpush1.msra.mxu0 0.0
        %1457 = vmatprep.subr.mxu0 0.0
        %1458 = vmatpush1.msra.mxu0 0.0
        %1459 = vmatprep.subr.mxu0 0.0
        %1460 = vmatpush1.msra.mxu0 0.0
        %1461 = vmatprep.subr.mxu0 0.0
        %1462 = vmatpush1.msra.mxu0 0.0
        %1463 = vmatprep.subr.mxu0 0.0
        %1464 = vmatpush1.msra.mxu0 0.0
        %1465 = vmatprep.subr.mxu0 0.0
        %1466 = vmatpush1.msra.mxu0 0.0
        %1467 = vmatprep.subr.mxu0 0.0
        %1468 = vmatpush1.msra.mxu0 0.0
        %1469 = vmatprep.subr.mxu0 0.0
        %1470 = vmatpush1.msra.mxu0 0.0
        %1471 = vmatprep.subr.mxu0 0.0
        %1472 = vmatpush1.msra.mxu0 0.0
        %1473 = vmatprep.subr.mxu0 0.0
        %1474 = vmatpush1.msra.mxu0 0.0
        %1475 = vmatprep.subr.mxu0 0.0
        %1476 = vmatpush1.msra.mxu0 0.0
        %1477 = vmatprep.subr.mxu0 0.0
        %1478 = vmatpush1.msra.mxu0 0.0
        %1479 = vmatprep.subr.mxu0 0.0
        %1480 = vmatpush1.msra.mxu0 0.0
        %1481 = vmatprep.subr.mxu0 0.0
        %1482 = vmatpush1.msra.mxu0 0.0
        %1483 = vmatprep.subr.mxu0 0.0
        %1484 = vmatpush1.msra.mxu0 0.0
        %1485 = vmatprep.subr.mxu0 0.0
        %1486 = vmatpush1.msra.mxu0 0.0
        %1487 = vmatprep.subr.mxu0 0.0
        %1488 = vmatpush1.msra.mxu0 0.0
        %1489 = vmatprep.subr.mxu0 0.0
        %1490 = vmatpush1.msra.mxu0 0.0
        %1491 = vmatprep.subr.mxu0 0.0
        %1492 = vmatpush1.msra.mxu0 0.0
        %1493 = vmatprep.subr.mxu0 0.0
        %1494 = vmatpush1.msra.mxu0 0.0
        %1495 = vmatprep.subr.mxu0 0.0
        %1496 = vmatpush1.msra.mxu0 0.0
        %1497 = vmatprep.mubr.f32.mxu0 0.0
        %1498 = vmatmul.mubr.f32.gmra.mrb[0].mxu0 %v1429
        %v1499 = vpop.f32.mrb[0].mxu0
        %v1500 = vadd.f32 0.0, %v1499
        %v1501 = vpop.f32.mrb[0].mxu0
        %v1502 = vadd.f32 0.0, %v1501
        %1503 = vmatprep.mubr.f32.mxu0 0.0
        %1504 = vmatmul.mubr.f32.gmra.mrb[0].mxu0 %v1431
        %v1505 = vpop.f32.mrb[0].mxu0
        %v1506 = vadd.f32 0.0, %v1505
        %v1507 = vpop.f32.mrb[0].mxu0
        %v1508 = vadd.f32 0.0, %v1507
        %1509 = vdwg.mxu0
        %1510 = vmatprep.subr.mxu0 %v1388
        %1511 = vmatpush1.msra.mxu0 %v1387
        %1512 = vmatprep.subr.mxu0 %v1392
        %1513 = vmatpush1.msra.mxu0 %v1391
        %1514 = vmatprep.subr.mxu0 %v1396
        %1515 = vmatpush1.msra.mxu0 %v1395
        %1516 = vmatprep.subr.mxu0 %v1400
        %1517 = vmatpush1.msra.mxu0 %v1399
        %1518 = vmatprep.subr.mxu0 %v1404
        %1519 = vmatpush1.msra.mxu0 %v1403
        %1520 = vmatprep.subr.mxu0 %v1408
        %1521 = vmatpush1.msra.mxu0 %v1407
        %1522 = vmatprep.subr.mxu0 %v1412
        %1523 = vmatpush1.msra.mxu0 %v1411
        %1524 = vmatprep.subr.mxu0 %v1416
        %1525 = vmatpush1.msra.mxu0 %v1415
        %1526 = vmatprep.subr.mxu0 0.0
        %1527 = vmatpush1.msra.mxu0 0.0
        %1528 = vmatprep.subr.mxu0 0.0
        %1529 = vmatpush1.msra.mxu0 0.0
        %1530 = vmatprep.subr.mxu0 0.0
        %1531 = vmatpush1.msra.mxu0 0.0
        %1532 = vmatprep.subr.mxu0 0.0
        %1533 = vmatpush1.msra.mxu0 0.0
        %1534 = vmatprep.subr.mxu0 0.0
        %1535 = vmatpush1.msra.mxu0 0.0
        %1536 = vmatprep.subr.mxu0 0.0
        %1537 = vmatpush1.msra.mxu0 0.0
        %1538 = vmatprep.subr.mxu0 0.0
        %1539 = vmatpush1.msra.mxu0 0.0
        %1540 = vmatprep.subr.mxu0 0.0
        %1541 = vmatpush1.msra.mxu0 0.0
        %1542 = vmatprep.subr.mxu0 0.0
        %1543 = vmatpush1.msra.mxu0 0.0
        %1544 = vmatprep.subr.mxu0 0.0
        %1545 = vmatpush1.msra.mxu0 0.0
        %1546 = vmatprep.subr.mxu0 0.0
        %1547 = vmatpush1.msra.mxu0 0.0
        %1548 = vmatprep.subr.mxu0 0.0
        %1549 = vmatpush1.msra.mxu0 0.0
        %1550 = vmatprep.subr.mxu0 0.0
        %1551 = vmatpush1.msra.mxu0 0.0
        %1552 = vmatprep.subr.mxu0 0.0
        %1553 = vmatpush1.msra.mxu0 0.0
        %1554 = vmatprep.subr.mxu0 0.0
        %1555 = vmatpush1.msra.mxu0 0.0
        %1556 = vmatprep.subr.mxu0 0.0
        %1557 = vmatpush1.msra.mxu0 0.0
        %1558 = vmatprep.subr.mxu0 0.0
        %1559 = vmatpush1.msra.mxu0 0.0
        %1560 = vmatprep.subr.mxu0 0.0
        %1561 = vmatpush1.msra.mxu0 0.0
        %1562 = vmatprep.subr.mxu0 0.0
        %1563 = vmatpush1.msra.mxu0 0.0
        %1564 = vmatprep.subr.mxu0 0.0
        %1565 = vmatpush1.msra.mxu0 0.0
        %1566 = vmatprep.subr.mxu0 0.0
        %1567 = vmatpush1.msra.mxu0 0.0
        %1568 = vmatprep.subr.mxu0 0.0
        %1569 = vmatpush1.msra.mxu0 0.0
        %1570 = vmatprep.subr.mxu0 0.0
        %1571 = vmatpush1.msra.mxu0 0.0
        %1572 = vmatprep.subr.mxu0 0.0
        %1573 = vmatpush1.msra.mxu0 0.0
        %1574 = vmatprep.mubr.f32.mxu0 0.0
        %1575 = vmatmul.mubr.f32.gmra.mrb[0].mxu0 %v1429
        %v1576 = vpop.f32.mrb[0].mxu0
        %v1577 = vadd.f32 0.0, %v1576
        %v1578 = vpop.f32.mrb[0].mxu0
        %v1579 = vadd.f32 0.0, %v1578
        %1580 = vmatprep.mubr.f32.mxu0 0.0
        %1581 = vmatmul.mubr.f32.gmra.mrb[0].mxu0 %v1431
        %v1582 = vpop.f32.mrb[0].mxu0
        %v1583 = vadd.f32 0.0, %v1582
        %v1584 = vpop.f32.mrb[0].mxu0
        %v1585 = vadd.f32 0.0, %v1584
        %1586 = vdwg.mxu0
        %v1587 = vld [vmem:[%s8] sm:$0xf]
        %v1589 = vlaneseq
        %v1590 = vshrl.u32 %v1589, 7
        %v1591 = vsub.s32 0, %v1590
        %v1592 = vrot.slane %v1587, %v1591
        %v1593 = vlaneseq
        %v1594 = vshrl.u32 %v1593, 7
        %v1595 = vsub.s32 1, %v1594
        %v1596 = vrot.slane %v1587, %v1595
        %v1597 = vlaneseq
        %v1598 = vshrl.u32 %v1597, 7
        %v1599 = vsub.s32 2, %v1598
        %v1600 = vrot.slane %v1587, %v1599
        %v1601 = vlaneseq
        %v1602 = vshrl.u32 %v1601, 7
        %v1603 = vsub.s32 3, %v1602
        %v1604 = vrot.slane %v1587, %v1603
        %v1609 = vsub.f32 %v1500, %v1592
        %v1610 = vsub.f32 %v1502, %v1596
        %v1611 = vsub.f32 %v1577, %v1600
        %v1612 = vsub.f32 %v1579, %v1604
        %v1613 = vsub.f32 %v1506, %v1592
        %v1614 = vsub.f32 %v1508, %v1596
        %v1615 = vsub.f32 %v1583, %v1600
        %v1616 = vsub.f32 %v1585, %v1604
        %v1617 = vmul.f32 %v1609, 2.3333333
        %v1618 = vmul.f32 %v1610, 2.3333333
        %v1619 = vmul.f32 %v1611, 2.3333333
        %v1620 = vmul.f32 %v1612, 2.3333333
        %v1621 = vmul.f32 %v1613, 2.3333333
        %v1622 = vmul.f32 %v1614, 2.3333333
        %v1623 = vmul.f32 %v1615, 2.3333333
        %v1624 = vmul.f32 %v1616, 2.3333333
        %v1625 = vmul.f32 %v1617, %v1617
        %v1626 = vmul.f32 %v1618, %v1618
        %v1627 = vmul.f32 %v1619, %v1619
        %v1628 = vmul.f32 %v1620, %v1620
        %v1629 = vmul.f32 %v1621, %v1621
        %v1630 = vmul.f32 %v1622, %v1622
        %v1631 = vmul.f32 %v1623, %v1623
        %v1632 = vmul.f32 %v1624, %v1624
        %v1633 = vsub.f32 0.0, %v1625
        %v1634 = vsub.f32 0.0, %v1626
        %v1635 = vsub.f32 0.0, %v1627
        %v1636 = vsub.f32 0.0, %v1628
        %v1637 = vsub.f32 0.0, %v1629
        %v1638 = vsub.f32 0.0, %v1630
        %v1639 = vsub.f32 0.0, %v1631
        %v1640 = vsub.f32 0.0, %v1632
        %v1641 = vmul.f32 %v1633, 1.442695
        %v1642 = vpow.pop %v1641
        %v1643 = vmul.f32 %v1634, 1.442695
        %v1644 = vpow.pop %v1643
        %v1645 = vmul.f32 %v1635, 1.442695
        %v1646 = vpow.pop %v1645
        %v1647 = vmul.f32 %v1636, 1.442695
        %v1648 = vpow.pop %v1647
        %v1649 = vmul.f32 %v1637, 1.442695
        %v1650 = vpow.pop %v1649
        %v1651 = vmul.f32 %v1638, 1.442695
        %v1652 = vpow.pop %v1651
        %v1653 = vmul.f32 %v1639, 1.442695
        %v1654 = vpow.pop %v1653
        %v1655 = vmul.f32 %v1640, 1.442695
        %v1656 = vpow.pop %v1655
        %v1657 = vld [vmem:[%s9] sm:$0xf]
        %v1659 = vlaneseq
        %v1660 = vshrl.u32 %v1659, 7
        %v1661 = vsub.s32 0, %v1660
        %v1662 = vrot.slane %v1657, %v1661
        %v1663 = vlaneseq
        %v1664 = vshrl.u32 %v1663, 7
        %v1665 = vsub.s32 1, %v1664
        %v1666 = vrot.slane %v1657, %v1665
        %v1667 = vlaneseq
        %v1668 = vshrl.u32 %v1667, 7
        %v1669 = vsub.s32 2, %v1668
        %v1670 = vrot.slane %v1657, %v1669
        %v1671 = vlaneseq
        %v1672 = vshrl.u32 %v1671, 7
        %v1673 = vsub.s32 3, %v1672
        %v1674 = vrot.slane %v1657, %v1673
        %v1679 = vsub.f32 %v1500, %v1662
        %v1680 = vsub.f32 %v1502, %v1666
        %v1681 = vsub.f32 %v1577, %v1670
        %v1682 = vsub.f32 %v1579, %v1674
        %v1683 = vsub.f32 %v1506, %v1662
        %v1684 = vsub.f32 %v1508, %v1666
        %v1685 = vsub.f32 %v1583, %v1670
        %v1686 = vsub.f32 %v1585, %v1674
        %v1687 = vmul.f32 %v1679, 1.6666666
        %v1688 = vmul.f32 %v1680, 1.6666666
        %v1689 = vmul.f32 %v1681, 1.6666666
        %v1690 = vmul.f32 %v1682, 1.6666666
        %v1691 = vmul.f32 %v1683, 1.6666666
        %v1692 = vmul.f32 %v1684, 1.6666666
        %v1693 = vmul.f32 %v1685, 1.6666666
        %v1694 = vmul.f32 %v1686, 1.6666666
        %v1695 = vmul.f32 %v1687, %v1687
        %v1696 = vmul.f32 %v1688, %v1688
        %v1697 = vmul.f32 %v1689, %v1689
        %v1698 = vmul.f32 %v1690, %v1690
        %v1699 = vmul.f32 %v1691, %v1691
        %v1700 = vmul.f32 %v1692, %v1692
        %v1701 = vmul.f32 %v1693, %v1693
        %v1702 = vmul.f32 %v1694, %v1694
        %v1703 = vmul.f32 %v1695, %v1687
        %v1704 = vmul.f32 %v1696, %v1688
        %v1705 = vmul.f32 %v1697, %v1689
        %v1706 = vmul.f32 %v1698, %v1690
        %v1707 = vmul.f32 %v1699, %v1691
        %v1708 = vmul.f32 %v1700, %v1692
        %v1709 = vmul.f32 %v1701, %v1693
        %v1710 = vmul.f32 %v1702, %v1694
        %v1711 = vmul.f32 %v1703, 0.16666667
        %v1712 = vmul.f32 %v1704, 0.16666667
        %v1713 = vmul.f32 %v1705, 0.16666667
        %v1714 = vmul.f32 %v1706, 0.16666667
        %v1715 = vmul.f32 %v1707, 0.16666667
        %v1716 = vmul.f32 %v1708, 0.16666667
        %v1717 = vmul.f32 %v1709, 0.16666667
        %v1718 = vmul.f32 %v1710, 0.16666667
        %v1719 = vmul.f32 %v1703, -3.0
        %v1720 = vmul.f32 %v1704, -3.0
        %v1721 = vmul.f32 %v1705, -3.0
        %v1722 = vmul.f32 %v1706, -3.0
        %v1723 = vmul.f32 %v1707, -3.0
        %v1724 = vmul.f32 %v1708, -3.0
        %v1725 = vmul.f32 %v1709, -3.0
        %v1726 = vmul.f32 %v1710, -3.0
        %v1727 = vmul.f32 %v1695, 12.0
        %v1728 = vmul.f32 %v1696, 12.0
        %v1729 = vmul.f32 %v1697, 12.0
        %v1730 = vmul.f32 %v1698, 12.0
        %v1731 = vmul.f32 %v1699, 12.0
        %v1732 = vmul.f32 %v1700, 12.0
        %v1733 = vmul.f32 %v1701, 12.0
        %v1734 = vmul.f32 %v1702, 12.0
        %v1735 = vadd.f32 %v1719, %v1727
        %v1736 = vadd.f32 %v1720, %v1728
        %v1737 = vadd.f32 %v1721, %v1729
        %v1738 = vadd.f32 %v1722, %v1730
        %v1739 = vadd.f32 %v1723, %v1731
        %v1740 = vadd.f32 %v1724, %v1732
        %v1741 = vadd.f32 %v1725, %v1733
        %v1742 = vadd.f32 %v1726, %v1734
        %v1743 = vmul.f32 %v1687, 12.0
        %v1744 = vmul.f32 %v1688, 12.0
        %v1745 = vmul.f32 %v1689, 12.0
        %v1746 = vmul.f32 %v1690, 12.0
        %v1747 = vmul.f32 %v1691, 12.0
        %v1748 = vmul.f32 %v1692, 12.0
        %v1749 = vmul.f32 %v1693, 12.0
        %v1750 = vmul.f32 %v1694, 12.0
        %v1751 = vsub.f32 %v1735, %v1743
        %v1752 = vsub.f32 %v1736, %v1744
        %v1753 = vsub.f32 %v1737, %v1745
        %v1754 = vsub.f32 %v1738, %v1746
        %v1755 = vsub.f32 %v1739, %v1747
        %v1756 = vsub.f32 %v1740, %v1748
        %v1757 = vsub.f32 %v1741, %v1749
        %v1758 = vsub.f32 %v1742, %v1750
        %v1759 = vadd.f32 %v1751, 4.0
        %v1760 = vadd.f32 %v1752, 4.0
        %v1761 = vadd.f32 %v1753, 4.0
        %v1762 = vadd.f32 %v1754, 4.0
        %v1763 = vadd.f32 %v1755, 4.0
        %v1764 = vadd.f32 %v1756, 4.0
        %v1765 = vadd.f32 %v1757, 4.0
        %v1766 = vadd.f32 %v1758, 4.0
        %v1767 = vmul.f32 %v1759, 0.16666667
        %v1768 = vmul.f32 %v1760, 0.16666667
        %v1769 = vmul.f32 %v1761, 0.16666667
        %v1770 = vmul.f32 %v1762, 0.16666667
        %v1771 = vmul.f32 %v1763, 0.16666667
        %v1772 = vmul.f32 %v1764, 0.16666667
        %v1773 = vmul.f32 %v1765, 0.16666667
        %v1774 = vmul.f32 %v1766, 0.16666667
        %v1775 = vmul.f32 %v1703, 3.0
        %v1776 = vmul.f32 %v1704, 3.0
        %v1777 = vmul.f32 %v1705, 3.0
        %v1778 = vmul.f32 %v1706, 3.0
        %v1779 = vmul.f32 %v1707, 3.0
        %v1780 = vmul.f32 %v1708, 3.0
        %v1781 = vmul.f32 %v1709, 3.0
        %v1782 = vmul.f32 %v1710, 3.0
        %v1783 = vmul.f32 %v1695, 24.0
        %v1784 = vmul.f32 %v1696, 24.0
        %v1785 = vmul.f32 %v1697, 24.0
        %v1786 = vmul.f32 %v1698, 24.0
        %v1787 = vmul.f32 %v1699, 24.0
        %v1788 = vmul.f32 %v1700, 24.0
        %v1789 = vmul.f32 %v1701, 24.0
        %v1790 = vmul.f32 %v1702, 24.0
        %v1791 = vsub.f32 %v1775, %v1783
        %v1792 = vsub.f32 %v1776, %v1784
        %v1793 = vsub.f32 %v1777, %v1785
        %v1794 = vsub.f32 %v1778, %v1786
        %v1795 = vsub.f32 %v1779, %v1787
        %v1796 = vsub.f32 %v1780, %v1788
        %v1797 = vsub.f32 %v1781, %v1789
        %v1798 = vsub.f32 %v1782, %v1790
        %v1799 = vmul.f32 %v1687, 60.0
        %v1800 = vmul.f32 %v1688, 60.0
        %v1801 = vmul.f32 %v1689, 60.0
        %v1802 = vmul.f32 %v1690, 60.0
        %v1803 = vmul.f32 %v1691, 60.0
        %v1804 = vmul.f32 %v1692, 60.0
        %v1805 = vmul.f32 %v1693, 60.0
        %v1806 = vmul.f32 %v1694, 60.0
        %v1807 = vadd.f32 %v1791, %v1799
        %v1808 = vadd.f32 %v1792, %v1800
        %v1809 = vadd.f32 %v1793, %v1801
        %v1810 = vadd.f32 %v1794, %v1802
        %v1811 = vadd.f32 %v1795, %v1803
        %v1812 = vadd.f32 %v1796, %v1804
        %v1813 = vadd.f32 %v1797, %v1805
        %v1814 = vadd.f32 %v1798, %v1806
        %v1815 = vsub.f32 %v1807, 44.0
        %v1816 = vsub.f32 %v1808, 44.0
        %v1817 = vsub.f32 %v1809, 44.0
        %v1818 = vsub.f32 %v1810, 44.0
        %v1819 = vsub.f32 %v1811, 44.0
        %v1820 = vsub.f32 %v1812, 44.0
        %v1821 = vsub.f32 %v1813, 44.0
        %v1822 = vsub.f32 %v1814, 44.0
        %v1823 = vmul.f32 %v1815, 0.16666667
        %v1824 = vmul.f32 %v1816, 0.16666667
        %v1825 = vmul.f32 %v1817, 0.16666667
        %v1826 = vmul.f32 %v1818, 0.16666667
        %v1827 = vmul.f32 %v1819, 0.16666667
        %v1828 = vmul.f32 %v1820, 0.16666667
        %v1829 = vmul.f32 %v1821, 0.16666667
        %v1830 = vmul.f32 %v1822, 0.16666667
        %v1831 = vsub.f32 4.0, %v1687
        %v1832 = vsub.f32 4.0, %v1688
        %v1833 = vsub.f32 4.0, %v1689
        %v1834 = vsub.f32 4.0, %v1690
        %v1835 = vsub.f32 4.0, %v1691
        %v1836 = vsub.f32 4.0, %v1692
        %v1837 = vsub.f32 4.0, %v1693
        %v1838 = vsub.f32 4.0, %v1694
        %v1839 = vmul.f32 %v1831, %v1831
        %v1840 = vmul.f32 %v1832, %v1832
        %v1841 = vmul.f32 %v1833, %v1833
        %v1842 = vmul.f32 %v1834, %v1834
        %v1843 = vmul.f32 %v1835, %v1835
        %v1844 = vmul.f32 %v1836, %v1836
        %v1845 = vmul.f32 %v1837, %v1837
        %v1846 = vmul.f32 %v1838, %v1838
        %v1847 = vmul.f32 %v1839, %v1831
        %v1848 = vmul.f32 %v1840, %v1832
        %v1849 = vmul.f32 %v1841, %v1833
        %v1850 = vmul.f32 %v1842, %v1834
        %v1851 = vmul.f32 %v1843, %v1835
        %v1852 = vmul.f32 %v1844, %v1836
        %v1853 = vmul.f32 %v1845, %v1837
        %v1854 = vmul.f32 %v1846, %v1838
        %v1855 = vmul.f32 %v1847, 0.16666667
        %v1856 = vmul.f32 %v1848, 0.16666667
        %v1857 = vmul.f32 %v1849, 0.16666667
        %v1858 = vmul.f32 %v1850, 0.16666667
        %v1859 = vmul.f32 %v1851, 0.16666667
        %v1860 = vmul.f32 %v1852, 0.16666667
        %v1861 = vmul.f32 %v1853, 0.16666667
        %v1862 = vmul.f32 %v1854, 0.16666667
        %vm1863 = vcmp.lt.f32.partialorder %v1687, 1.0
        %vm1864 = vcmp.lt.f32.partialorder %v1688, 1.0
        %vm1865 = vcmp.lt.f32.partialorder %v1689, 1.0
        %vm1866 = vcmp.lt.f32.partialorder %v1690, 1.0
        %vm1867 = vcmp.lt.f32.partialorder %v1691, 1.0
        %vm1868 = vcmp.lt.f32.partialorder %v1692, 1.0
        %vm1869 = vcmp.lt.f32.partialorder %v1693, 1.0
        %vm1870 = vcmp.lt.f32.partialorder %v1694, 1.0
        %vm1871 = vcmp.lt.f32.partialorder %v1687, 2.0
        %vm1872 = vcmp.lt.f32.partialorder %v1688, 2.0
        %vm1873 = vcmp.lt.f32.partialorder %v1689, 2.0
        %vm1874 = vcmp.lt.f32.partialorder %v1690, 2.0
        %vm1875 = vcmp.lt.f32.partialorder %v1691, 2.0
        %vm1876 = vcmp.lt.f32.partialorder %v1692, 2.0
        %vm1877 = vcmp.lt.f32.partialorder %v1693, 2.0
        %vm1878 = vcmp.lt.f32.partialorder %v1694, 2.0
        %vm1879 = vcmp.lt.f32.partialorder %v1687, 3.0
        %vm1880 = vcmp.lt.f32.partialorder %v1688, 3.0
        %vm1881 = vcmp.lt.f32.partialorder %v1689, 3.0
        %vm1882 = vcmp.lt.f32.partialorder %v1690, 3.0
        %vm1883 = vcmp.lt.f32.partialorder %v1691, 3.0
        %vm1884 = vcmp.lt.f32.partialorder %v1692, 3.0
        %vm1885 = vcmp.lt.f32.partialorder %v1693, 3.0
        %vm1886 = vcmp.lt.f32.partialorder %v1694, 3.0
        %v1887 = vsel %vm1879, %v1823, %v1855
        %v1888 = vsel %vm1880, %v1824, %v1856
        %v1889 = vsel %vm1881, %v1825, %v1857
        %v1890 = vsel %vm1882, %v1826, %v1858
        %v1891 = vsel %vm1883, %v1827, %v1859
        %v1892 = vsel %vm1884, %v1828, %v1860
        %v1893 = vsel %vm1885, %v1829, %v1861
        %v1894 = vsel %vm1886, %v1830, %v1862
        %v1895 = vsel %vm1871, %v1767, %v1887
        %v1896 = vsel %vm1872, %v1768, %v1888
        %v1897 = vsel %vm1873, %v1769, %v1889
        %v1898 = vsel %vm1874, %v1770, %v1890
        %v1899 = vsel %vm1875, %v1771, %v1891
        %v1900 = vsel %vm1876, %v1772, %v1892
        %v1901 = vsel %vm1877, %v1773, %v1893
        %v1902 = vsel %vm1878, %v1774, %v1894
        %v1903 = vsel %vm1863, %v1711, %v1895
        %v1904 = vsel %vm1864, %v1712, %v1896
        %v1905 = vsel %vm1865, %v1713, %v1897
        %v1906 = vsel %vm1866, %v1714, %v1898
        %v1907 = vsel %vm1867, %v1715, %v1899
        %v1908 = vsel %vm1868, %v1716, %v1900
        %v1909 = vsel %vm1869, %v1717, %v1901
        %v1910 = vsel %vm1870, %v1718, %v1902
        %vm1911 = vcmp.ge.f32.partialorder %v1687, 0.0
        %vm1912 = vcmp.ge.f32.partialorder %v1688, 0.0
        %vm1913 = vcmp.ge.f32.partialorder %v1689, 0.0
        %vm1914 = vcmp.ge.f32.partialorder %v1690, 0.0
        %vm1915 = vcmp.ge.f32.partialorder %v1691, 0.0
        %vm1916 = vcmp.ge.f32.partialorder %v1692, 0.0
        %vm1917 = vcmp.ge.f32.partialorder %v1693, 0.0
        %vm1918 = vcmp.ge.f32.partialorder %v1694, 0.0
        %vm1919 = vcmp.lt.f32.partialorder %v1687, 4.0
        %vm1920 = vcmp.lt.f32.partialorder %v1688, 4.0
        %vm1921 = vcmp.lt.f32.partialorder %v1689, 4.0
        %vm1922 = vcmp.lt.f32.partialorder %v1690, 4.0
        %vm1923 = vcmp.lt.f32.partialorder %v1691, 4.0
        %vm1924 = vcmp.lt.f32.partialorder %v1692, 4.0
        %vm1925 = vcmp.lt.f32.partialorder %v1693, 4.0
        %vm1926 = vcmp.lt.f32.partialorder %v1694, 4.0
        %vm1927 = vmand %vm1911, %vm1919
        %vm1928 = vmand %vm1912, %vm1920
        %vm1929 = vmand %vm1913, %vm1921
        %vm1930 = vmand %vm1914, %vm1922
        %vm1931 = vmand %vm1915, %vm1923
        %vm1932 = vmand %vm1916, %vm1924
        %vm1933 = vmand %vm1917, %vm1925
        %vm1934 = vmand %vm1918, %vm1926
        %v1935 = vsel %vm1927, %v1903, 0.0
        %v1936 = vsel %vm1928, %v1904, 0.0
        %v1937 = vsel %vm1929, %v1905, 0.0
        %v1938 = vsel %vm1930, %v1906, 0.0
        %v1939 = vsel %vm1931, %v1907, 0.0
        %v1940 = vsel %vm1932, %v1908, 0.0
        %v1941 = vsel %vm1933, %v1909, 0.0
        %v1942 = vsel %vm1934, %v1910, 0.0
        %v1943 = vadd.f32 %v1935, %v1642
        %v1944 = vadd.f32 %v1936, %v1644
        %v1945 = vadd.f32 %v1937, %v1646
        %v1946 = vadd.f32 %v1938, %v1648
        %v1947 = vadd.f32 %v1939, %v1650
        %v1948 = vadd.f32 %v1940, %v1652
        %v1949 = vadd.f32 %v1941, %v1654
        %v1950 = vadd.f32 %v1942, %v1656
        %v1951 = vmax.f32 %v1382, 0.0
        %v1952 = vmax.f32 %v1383, 0.0
        %v1953 = vmax.f32 %v1384, 0.0
        %v1957 = vrot.slane %v1951, 2
        %v1958 = vrot.slane %v1952, 2
        %v1959 = vsel %vm412, %v1957, %v1958
        %v1960 = vrot.slane %v1953, 2
        %v1961 = vsel %vm412, %v1958, %v1960
        %1962 = vrot.lane.b32.xlu0 %v1959, 120
        %v1963 = vpop.permute.xlu0 %1962
        %1964 = vrot.lane.b32.xlu0 %v1961, 120
        %v1965 = vpop.permute.xlu0 %1964
        %v1966 = vld [vmem:[%s10] sm:$0xff]
        %v1967 = vld [vmem:[%s10 + $0x8] sm:$0xff]
        %v1968 = vld [vmem:[%s10 + $0x10] sm:$0xff]
        %v1969 = vld [vmem:[%s10 + $0x18] sm:$0xff]
        %v1970 = vld [vmem:[%s10 + $0x20] sm:$0xff]
        %v1971 = vld [vmem:[%s10 + $0x28] sm:$0xff]
        %v1972 = vld [vmem:[%s10 + $0x30] sm:$0xff]
        %v1973 = vld [vmem:[%s10 + $0x38] sm:$0xff]
        %v1974 = vld [vmem:[%s10 + $0x40] sm:$0xff]
        %v1975 = vld [vmem:[%s10 + $0x48] sm:$0xff]
        %v1976 = vld [vmem:[%s10 + $0x50] sm:$0xff]
        %v1977 = vld [vmem:[%s10 + $0x58] sm:$0xff]
        %v1978 = vld [vmem:[%s10 + $0x60] sm:$0xff]
        %v1979 = vld [vmem:[%s10 + $0x68] sm:$0xff]
        %v1980 = vld [vmem:[%s10 + $0x70] sm:$0xff]
        %v1981 = vld [vmem:[%s10 + $0x78] sm:$0xff]
        %v1982 = vld [vmem:[%s10 + $0x80] sm:$0xff]
        %v1983 = vld [vmem:[%s10 + $0x88] sm:$0xff]
        %v1984 = vld [vmem:[%s10 + $0x90] sm:$0xff]
        %v1985 = vld [vmem:[%s10 + $0x98] sm:$0xff]
        %v1986 = vld [vmem:[%s10 + $0xa0] sm:$0xff]
        %v1987 = vld [vmem:[%s10 + $0xa8] sm:$0xff]
        %v1988 = vld [vmem:[%s10 + $0xb0] sm:$0xff]
        %v1989 = vld [vmem:[%s10 + $0xb8] sm:$0xff]
        %v1990 = vld [vmem:[%s10 + $0xc0] sm:$0xff]
        %v1991 = vld [vmem:[%s10 + $0xc8] sm:$0xff]
        %v1992 = vld [vmem:[%s10 + $0xd0] sm:$0xff]
        %v1993 = vld [vmem:[%s10 + $0xd8] sm:$0xff]
        %v1994 = vld [vmem:[%s10 + $0xe0] sm:$0xff]
        %v1995 = vld [vmem:[%s10 + $0xe8] sm:$0xff]
        %v1996 = vld [vmem:[%s10 + $0xf0] sm:$0xff]
        %v1997 = vld [vmem:[%s10 + $0xf8] sm:$0xff]
        %v1998 = vld [vmem:[%s10 + $0x100] sm:$0xff]
        %v1999 = vld [vmem:[%s10 + $0x108] sm:$0xff]
        %v2000 = vld [vmem:[%s10 + $0x110] sm:$0xff]
        %v2001 = vld [vmem:[%s10 + $0x118] sm:$0xff]
        %v2002 = vld [vmem:[%s10 + $0x120] sm:$0xff]
        %v2003 = vld [vmem:[%s10 + $0x128] sm:$0xff]
        %v2004 = vld [vmem:[%s10 + $0x130] sm:$0xff]
        %v2005 = vld [vmem:[%s10 + $0x138] sm:$0xff]
        %v2006 = vld [vmem:[%s10 + $0x140] sm:$0xff]
        %v2007 = vld [vmem:[%s10 + $0x148] sm:$0xff]
        %v2008 = vld [vmem:[%s10 + $0x150] sm:$0xff]
        %v2009 = vld [vmem:[%s10 + $0x158] sm:$0xff]
        %v2010 = vld [vmem:[%s10 + $0x160] sm:$0xff]
        %v2011 = vld [vmem:[%s10 + $0x168] sm:$0xff]
        %v2012 = vld [vmem:[%s10 + $0x170] sm:$0xff]
        %v2013 = vld [vmem:[%s10 + $0x178] sm:$0xff]
        %v2014 = vld [vmem:[%s10 + $0x180] sm:$0xff]
        %v2015 = vld [vmem:[%s10 + $0x188] sm:$0xff]
        %v2016 = vld [vmem:[%s10 + $0x190] sm:$0xff]
        %v2017 = vld [vmem:[%s10 + $0x198] sm:$0xff]
        %v2018 = vld [vmem:[%s10 + $0x1a0] sm:$0xff]
        %v2019 = vld [vmem:[%s10 + $0x1a8] sm:$0xff]
        %v2020 = vld [vmem:[%s10 + $0x1b0] sm:$0xff]
        %v2021 = vld [vmem:[%s10 + $0x1b8] sm:$0xff]
        %v2022 = vld [vmem:[%s10 + $0x1c0] sm:$0xff]
        %v2023 = vld [vmem:[%s10 + $0x1c8] sm:$0xff]
        %v2024 = vld [vmem:[%s10 + $0x1d0] sm:$0xff]
        %v2025 = vld [vmem:[%s10 + $0x1d8] sm:$0xff]
        %v2026 = vld [vmem:[%s10 + $0x1e0] sm:$0xff]
        %v2027 = vld [vmem:[%s10 + $0x1e8] sm:$0xff]
        %v2028 = vld [vmem:[%s10 + $0x1f0] sm:$0xff]
        %v2029 = vld [vmem:[%s10 + $0x1f8] sm:$0xff]
        %v2030 = vld [vmem:[%s10 + $0x200] sm:$0xff]
        %v2031 = vld [vmem:[%s10 + $0x208] sm:$0xff]
        %v2032 = vld [vmem:[%s10 + $0x210] sm:$0xff]
        %v2033 = vld [vmem:[%s10 + $0x218] sm:$0xff]
        %v2034 = vld [vmem:[%s10 + $0x220] sm:$0xff]
        %v2035 = vld [vmem:[%s10 + $0x228] sm:$0xff]
        %v2036 = vld [vmem:[%s10 + $0x230] sm:$0xff]
        %v2037 = vld [vmem:[%s10 + $0x238] sm:$0xff]
        %v2038 = vsel %vm683, %v1963, 0
        %v2040 = vsel %vm683, %v1965, 0
        %2042 = vmatprep.subr.mxu0 0.0
        %2043 = vmatpush1.msra.mxu0 %v1966
        %2044 = vmatprep.subr.mxu0 0.0
        %2045 = vmatpush1.msra.mxu0 %v1967
        %2046 = vmatprep.subr.mxu0 0.0
        %2047 = vmatpush1.msra.mxu0 %v1968
        %2048 = vmatprep.subr.mxu0 0.0
        %2049 = vmatpush1.msra.mxu0 %v1969
        %2050 = vmatprep.subr.mxu0 0.0
        %2051 = vmatpush1.msra.mxu0 %v1970
        %2052 = vmatprep.subr.mxu0 0.0
        %2053 = vmatpush1.msra.mxu0 %v1971
        %2054 = vmatprep.subr.mxu0 0.0
        %2055 = vmatpush1.msra.mxu0 %v1972
        %2056 = vmatprep.subr.mxu0 0.0
        %2057 = vmatpush1.msra.mxu0 %v1973
        %2058 = vmatprep.subr.mxu0 0.0
        %2059 = vmatpush1.msra.mxu0 %v1974
        %2060 = vmatprep.subr.mxu0 0.0
        %2061 = vmatpush1.msra.mxu0 %v1975
        %2062 = vmatprep.subr.mxu0 0.0
        %2063 = vmatpush1.msra.mxu0 %v1976
        %2064 = vmatprep.subr.mxu0 0.0
        %2065 = vmatpush1.msra.mxu0 %v1977
        %2066 = vmatprep.subr.mxu0 0.0
        %2067 = vmatpush1.msra.mxu0 %v1978
        %2068 = vmatprep.subr.mxu0 0.0
        %2069 = vmatpush1.msra.mxu0 %v1979
        %2070 = vmatprep.subr.mxu0 0.0
        %2071 = vmatpush1.msra.mxu0 %v1980
        %2072 = vmatprep.subr.mxu0 0.0
        %2073 = vmatpush1.msra.mxu0 %v1981
        %2074 = vmatprep.subr.mxu0 0.0
        %2075 = vmatpush1.msra.mxu0 %v1982
        %2076 = vmatprep.subr.mxu0 0.0
        %2077 = vmatpush1.msra.mxu0 %v1983
        %2078 = vmatprep.subr.mxu0 0.0
        %2079 = vmatpush1.msra.mxu0 %v1984
        %2080 = vmatprep.subr.mxu0 0.0
        %2081 = vmatpush1.msra.mxu0 %v1985
        %2082 = vmatprep.subr.mxu0 0.0
        %2083 = vmatpush1.msra.mxu0 %v1986
        %2084 = vmatprep.subr.mxu0 0.0
        %2085 = vmatpush1.msra.mxu0 %v1987
        %2086 = vmatprep.subr.mxu0 0.0
        %2087 = vmatpush1.msra.mxu0 %v1988
        %2088 = vmatprep.subr.mxu0 0.0
        %2089 = vmatpush1.msra.mxu0 %v1989
        %2090 = vmatprep.subr.mxu0 0.0
        %2091 = vmatpush1.msra.mxu0 %v1990
        %2092 = vmatprep.subr.mxu0 0.0
        %2093 = vmatpush1.msra.mxu0 %v1991
        %2094 = vmatprep.subr.mxu0 0.0
        %2095 = vmatpush1.msra.mxu0 %v1992
        %2096 = vmatprep.subr.mxu0 0.0
        %2097 = vmatpush1.msra.mxu0 %v1993
        %2098 = vmatprep.subr.mxu0 0.0
        %2099 = vmatpush1.msra.mxu0 %v1994
        %2100 = vmatprep.subr.mxu0 0.0
        %2101 = vmatpush1.msra.mxu0 %v1995
        %2102 = vmatprep.subr.mxu0 0.0
        %2103 = vmatpush1.msra.mxu0 %v1996
        %2104 = vmatprep.subr.mxu0 0.0
        %2105 = vmatpush1.msra.mxu0 %v1997
        %2106 = vmatprep.mubr.f32.mxu0 %v1944
        %2107 = vmatmul.mubr.f32.gmra.mrb[0].mxu0 %v1943
        %v2108 = vpop.f32.mrb[0].mxu0
        %v2109 = vadd.f32 0.0, %v2108
        %v2110 = vpop.f32.mrb[0].mxu0
        %2111 = vmatprep.mubr.f32.mxu0 %v1948
        %2112 = vmatmul.mubr.f32.gmra.mrb[0].mxu0 %v1947
        %v2113 = vpop.f32.mrb[0].mxu0
        %v2114 = vadd.f32 0.0, %v2113
        %v2115 = vpop.f32.mrb[0].mxu0
        %2116 = vdwg.mxu0
        %2117 = vmatprep.subr.mxu0 0.0
        %2118 = vmatpush1.msra.mxu0 %v1998
        %2119 = vmatprep.subr.mxu0 0.0
        %2120 = vmatpush1.msra.mxu0 %v1999
        %2121 = vmatprep.subr.mxu0 0.0
        %2122 = vmatpush1.msra.mxu0 %v2000
        %2123 = vmatprep.subr.mxu0 0.0
        %2124 = vmatpush1.msra.mxu0 %v2001
        %2125 = vmatprep.subr.mxu0 0.0
        %2126 = vmatpush1.msra.mxu0 %v2002
        %2127 = vmatprep.subr.mxu0 0.0
        %2128 = vmatpush1.msra.mxu0 %v2003
        %2129 = vmatprep.subr.mxu0 0.0
        %2130 = vmatpush1.msra.mxu0 %v2004
        %2131 = vmatprep.subr.mxu0 0.0
        %2132 = vmatpush1.msra.mxu0 %v2005
        %2133 = vmatprep.subr.mxu0 0.0
        %2134 = vmatpush1.msra.mxu0 %v2006
        %2135 = vmatprep.subr.mxu0 0.0
        %2136 = vmatpush1.msra.mxu0 %v2007
        %2137 = vmatprep.subr.mxu0 0.0
        %2138 = vmatpush1.msra.mxu0 %v2008
        %2139 = vmatprep.subr.mxu0 0.0
        %2140 = vmatpush1.msra.mxu0 %v2009
        %2141 = vmatprep.subr.mxu0 0.0
        %2142 = vmatpush1.msra.mxu0 %v2010
        %2143 = vmatprep.subr.mxu0 0.0
        %2144 = vmatpush1.msra.mxu0 %v2011
        %2145 = vmatprep.subr.mxu0 0.0
        %2146 = vmatpush1.msra.mxu0 %v2012
        %2147 = vmatprep.subr.mxu0 0.0
        %2148 = vmatpush1.msra.mxu0 %v2013
        %2149 = vmatprep.subr.mxu0 0.0
        %2150 = vmatpush1.msra.mxu0 %v2014
        %2151 = vmatprep.subr.mxu0 0.0
        %2152 = vmatpush1.msra.mxu0 %v2015
        %2153 = vmatprep.subr.mxu0 0.0
        %2154 = vmatpush1.msra.mxu0 %v2016
        %2155 = vmatprep.subr.mxu0 0.0
        %2156 = vmatpush1.msra.mxu0 %v2017
        %2157 = vmatprep.subr.mxu0 0.0
        %2158 = vmatpush1.msra.mxu0 %v2018
        %2159 = vmatprep.subr.mxu0 0.0
        %2160 = vmatpush1.msra.mxu0 %v2019
        %2161 = vmatprep.subr.mxu0 0.0
        %2162 = vmatpush1.msra.mxu0 %v2020
        %2163 = vmatprep.subr.mxu0 0.0
        %2164 = vmatpush1.msra.mxu0 %v2021
        %2165 = vmatprep.subr.mxu0 0.0
        %2166 = vmatpush1.msra.mxu0 %v2022
        %2167 = vmatprep.subr.mxu0 0.0
        %2168 = vmatpush1.msra.mxu0 %v2023
        %2169 = vmatprep.subr.mxu0 0.0
        %2170 = vmatpush1.msra.mxu0 %v2024
        %2171 = vmatprep.subr.mxu0 0.0
        %2172 = vmatpush1.msra.mxu0 %v2025
        %2173 = vmatprep.subr.mxu0 0.0
        %2174 = vmatpush1.msra.mxu0 %v2026
        %2175 = vmatprep.subr.mxu0 0.0
        %2176 = vmatpush1.msra.mxu0 %v2027
        %2177 = vmatprep.subr.mxu0 0.0
        %2178 = vmatpush1.msra.mxu0 %v2028
        %2179 = vmatprep.subr.mxu0 0.0
        %2180 = vmatpush1.msra.mxu0 %v2029
        %2181 = vmatprep.mubr.f32.mxu0 %v1946
        %2182 = vmatmul.mubr.f32.gmra.mrb[0].mxu0 %v1945
        %v2183 = vpop.f32.mrb[0].mxu0
        %v2184 = vadd.f32 %v2109, %v2183
        %v2185 = vpop.f32.mrb[0].mxu0
        %2186 = vmatprep.mubr.f32.mxu0 %v1950
        %2187 = vmatmul.mubr.f32.gmra.mrb[0].mxu0 %v1949
        %v2188 = vpop.f32.mrb[0].mxu0
        %v2189 = vadd.f32 %v2114, %v2188
        %v2190 = vpop.f32.mrb[0].mxu0
        %2191 = vdwg.mxu0
        %2192 = vmatprep.subr.mxu0 0.0
        %2193 = vmatpush1.msra.mxu0 %v2030
        %2194 = vmatprep.subr.mxu0 0.0
        %2195 = vmatpush1.msra.mxu0 %v2031
        %2196 = vmatprep.subr.mxu0 0.0
        %2197 = vmatpush1.msra.mxu0 %v2032
        %2198 = vmatprep.subr.mxu0 0.0
        %2199 = vmatpush1.msra.mxu0 %v2033
        %2200 = vmatprep.subr.mxu0 0.0
        %2201 = vmatpush1.msra.mxu0 %v2034
        %2202 = vmatprep.subr.mxu0 0.0
        %2203 = vmatpush1.msra.mxu0 %v2035
        %2204 = vmatprep.subr.mxu0 0.0
        %2205 = vmatpush1.msra.mxu0 %v2036
        %2206 = vmatprep.subr.mxu0 0.0
        %2207 = vmatpush1.msra.mxu0 %v2037
        %2208 = vmatprep.subr.mxu0 0.0
        %2209 = vmatpush1.msra.mxu0 0.0
        %2210 = vmatprep.subr.mxu0 0.0
        %2211 = vmatpush1.msra.mxu0 0.0
        %2212 = vmatprep.subr.mxu0 0.0
        %2213 = vmatpush1.msra.mxu0 0.0
        %2214 = vmatprep.subr.mxu0 0.0
        %2215 = vmatpush1.msra.mxu0 0.0
        %2216 = vmatprep.subr.mxu0 0.0
        %2217 = vmatpush1.msra.mxu0 0.0
        %2218 = vmatprep.subr.mxu0 0.0
        %2219 = vmatpush1.msra.mxu0 0.0
        %2220 = vmatprep.subr.mxu0 0.0
        %2221 = vmatpush1.msra.mxu0 0.0
        %2222 = vmatprep.subr.mxu0 0.0
        %2223 = vmatpush1.msra.mxu0 0.0
        %2224 = vmatprep.subr.mxu0 0.0
        %2225 = vmatpush1.msra.mxu0 0.0
        %2226 = vmatprep.subr.mxu0 0.0
        %2227 = vmatpush1.msra.mxu0 0.0
        %2228 = vmatprep.subr.mxu0 0.0
        %2229 = vmatpush1.msra.mxu0 0.0
        %2230 = vmatprep.subr.mxu0 0.0
        %2231 = vmatpush1.msra.mxu0 0.0
        %2232 = vmatprep.subr.mxu0 0.0
        %2233 = vmatpush1.msra.mxu0 0.0
        %2234 = vmatprep.subr.mxu0 0.0
        %2235 = vmatpush1.msra.mxu0 0.0
        %2236 = vmatprep.subr.mxu0 0.0
        %2237 = vmatpush1.msra.mxu0 0.0
        %2238 = vmatprep.subr.mxu0 0.0
        %2239 = vmatpush1.msra.mxu0 0.0
        %2240 = vmatprep.subr.mxu0 0.0
        %2241 = vmatpush1.msra.mxu0 0.0
        %2242 = vmatprep.subr.mxu0 0.0
        %2243 = vmatpush1.msra.mxu0 0.0
        %2244 = vmatprep.subr.mxu0 0.0
        %2245 = vmatpush1.msra.mxu0 0.0
        %2246 = vmatprep.subr.mxu0 0.0
        %2247 = vmatpush1.msra.mxu0 0.0
        %2248 = vmatprep.subr.mxu0 0.0
        %2249 = vmatpush1.msra.mxu0 0.0
        %2250 = vmatprep.subr.mxu0 0.0
        %2251 = vmatpush1.msra.mxu0 0.0
        %2252 = vmatprep.subr.mxu0 0.0
        %2253 = vmatpush1.msra.mxu0 0.0
        %2254 = vmatprep.subr.mxu0 0.0
        %2255 = vmatpush1.msra.mxu0 0.0
        %2256 = vmatprep.mubr.f32.mxu0 0.0
        %2257 = vmatmul.mubr.f32.gmra.mrb[0].mxu0 %v2038
        %v2258 = vpop.f32.mrb[0].mxu0
        %v2259 = vadd.f32 %v2184, %v2258
        %v2260 = vpop.f32.mrb[0].mxu0
        %2261 = vmatprep.mubr.f32.mxu0 0.0
        %2262 = vmatmul.mubr.f32.gmra.mrb[0].mxu0 %v2040
        %v2263 = vpop.f32.mrb[0].mxu0
        %v2264 = vadd.f32 %v2189, %v2263
        %v2265 = vpop.f32.mrb[0].mxu0
        %2266 = vdwg.mxu0
        %v2267 = vadd.f32 %v1137, %v2259
        %v2268 = vadd.f32 %v1138, %v2264
        %v2269 = vmax.f32 %v2267, 0.0
        %v2270 = vmax.f32 %v2268, 0.0
        %2271 = vst.msk [vmem:[%s379] sm:$0xff] %vm683, %v2269
        %2272 = vst.msk [vmem:[%s379 + $0x8] sm:$0xff] %vm683, %v2270
        %s2273 = sand.u32 %s269, 1
        %s2274 = scalar_lea.sflag [#allocation3], %s2273
        %s2275 = sand.u32 %s269, 1
        %s2276 = smul.addr %s2275, 16
        %s2277 = scalar_lea.vmem [#allocation2], %s2276
        // Predicated region
        $region65: #{tpu_custom_call.1} parent=63 // pred_check
          %p2278 = pneg %p279
        $region66: #{tpu_custom_call.1} parent=63 // pred_check_branch
          %2280 = sbr.rel (%p2278) target = $region68
        $region67: #{tpu_custom_call.1} parent=63 // pred_region
          %s2282 = ssub.s32 256, 256
          %2283 = vsyncadd %s2274, %s2282
          %s2284 = smul.addr %s25, 2
          %s2285 = smul.addr %s2284, 128
          %s2286 = scalar_lea.hbm %s11, %s2285
          %s2287 = sshll.u32 %s2277, 4
          %s2288 = int_to_ptr.vmem [resolvable:$true] %s2287
          %2293 = dma.vmem_to_hbm [thread:$0]  %s2288, 256, %s2286, %s2274, 128, 128, 8
        $region68: #{tpu_custom_call.1} parent=63 // pred_fallthru
          _
      $region64: #{tpu_custom_call.1} parent=5 // pred_fallthru
        _
      %p2294 = scmp.le.s32.totalorder 2, %s20
      // Predicated region
      $region69: #{tpu_custom_call.1} parent=5 // pred_check
        %p2295 = pneg %p2294
      $region70: #{tpu_custom_call.1} parent=5 // pred_check_branch
        %2297 = sbr.rel (%p2295) target = $region72
      $region71: #{tpu_custom_call.1} parent=5 // pred_region
        %s2298 = ssub.s32 %s20, 2
        // Predicated region
        $region73: #{tpu_custom_call.1} parent=71 // pred_check
          %p2299 = pneg %p285
        $region74: #{tpu_custom_call.1} parent=71 // pred_check_branch
          %2301 = sbr.rel (%p2299) target = $region76
        $region75: #{tpu_custom_call.1} parent=71 // pred_region
          %s2302 = sand.u32 %s270, 1
          %s2303 = scalar_lea.sflag [#allocation3], %s2302
          %s2304 = sand.u32 %s270, 1
          %s2305 = smul.addr %s2304, 16
          %s2306 = scalar_lea.vmem [#allocation2], %s2305
          %2307 = dma.done %s2303, 256
        $region76: #{tpu_custom_call.1} parent=71 // pred_fallthru
          _
      $region72: #{tpu_custom_call.1} parent=5 // pred_fallthru
        _
    $region6: #{tpu_custom_call.1} parent=1 // loop_footer
      %s24 = sadd.s32 1, %s20
    $region7: #{tpu_custom_call.1} parent=1 // loop_footer_branch
      %19 = sbr.rel target = $region3
    $region8: #{tpu_custom_call.1} parent=1 // loop_exit
      _
    %2308 = vsyncpa [#allocation3], 1
    %s2309 = scalar_lea.sflag [#allocation3], 1
    %2310 = vsyncpa %s2309, 1

</llo_original>
